<compile_context>
chip_gen: v5e
topology: v5e:2x2
jax: 0.10.0
libtpu: 0.0.40
codegen_flags: <defaults>
</compile_context>

<pallas_src>
import functools

import jax
import jax.numpy as jnp
import numpy as np
from jax.experimental import pallas as pl
from jax.experimental.pallas import tpu as pltpu

LANES = 128          # vreg lane width
MAX_TILE_ROWS = 64   # sublane rows per grid step -> 64*128 = 8192 points/step


def _round_up(v, m):
    return (v + m - 1) // m * m


def _harmonic_kernel(x_ref, out_ref, *, freqs, include_input, logspace):
    """x_ref: (C, R, 128) f32, out_ref: (out_dim, R, 128) f32.

    Output feature rows (matches torch.cat((sin, cos, x), -1) with the
    channel-major-by-frequency embed ordering):
      row c*H + h        -> sin(x_c * freq_h)
      row C*H + c*H + h  -> cos(x_c * freq_h)
      row 2*C*H + c      -> x_c              (if include_input)
    """
    c_dim = x_ref.shape[0]
    n_h = len(freqs)
    ch = c_dim * n_h
    for c in range(c_dim):
        xc = x_ref[c]                                    # (R, 128) dense vregs
        if logspace:
            # freq_h = omega0 * 2**h  =>  angle_h = 2 * angle_{h-1}.
            # 2 transcendentals per channel; remaining harmonics are VPU FMAs.
            ang0 = xc * freqs[0]                         # freqs[0] == omega0
            s, co = jnp.sin(ang0), jnp.cos(ang0)
            for h in range(n_h):
                if h > 0:
                    s, co = 2.0 * s * co, 1.0 - 2.0 * s * s   # double angle
                out_ref[c * n_h + h] = s
                out_ref[ch + c * n_h + h] = co
        else:
            for h in range(n_h):
                ang = xc * freqs[h]
                out_ref[c * n_h + h] = jnp.sin(ang)
                out_ref[ch + c * n_h + h] = jnp.cos(ang)
        if include_input:
            out_ref[2 * ch + c] = xc


def _pick_tile_rows(n_blk):
    if n_blk <= 8:
        return n_blk                       # full-extent block: always legal
    # >=2 grid steps so v7x can shard across both TensorCores; rows mult. of 8.
    half = pl.cdiv(n_blk, 2)
    return max(8, min(MAX_TILE_ROWS, _round_up(half, 8)))


def harmonic_embedding(x, *, n_harmonic_functions=6, omega0=1.0,
                       logspace=True, include_input=True):
    """Forward pass of HarmonicEmbedding. x: (..., C) -> (..., 2*C*H [+ C])."""
    x = jnp.asarray(x, jnp.float32)
    *batch, c_dim = x.shape
    n = int(np.prod(batch)) if batch else 1
    n_h = n_harmonic_functions
    out_dim = 2 * n_h * c_dim + (c_dim if include_input else 0)

    if logspace:
        freqs = omega0 * (2.0 ** np.arange(n_h, dtype=np.float32))
    else:
        freqs = omega0 * np.linspace(1.0, 2.0 ** (n_h - 1), n_h,
                                     dtype=np.float32)
    freqs = tuple(float(f) for f in freqs)   # plain scalars: no captured consts

    # Feature-major, lane-blocked view (C, n_blk, 128).  The input pad +
    # transpose is one cheap XLA pass over the (13x smaller) input.
    n_pad = _round_up(max(n, 1), LANES)
    n_blk = n_pad // LANES
    pts = x.reshape(n, c_dim)
    if n_pad != n:
        pts = jnp.pad(pts, ((0, n_pad - n), (0, 0)))
    pts_f = pts.T.reshape(c_dim, n_blk, LANES)

    tile_r = _pick_tile_rows(n_blk)
    grid = (pl.cdiv(n_blk, tile_r),)

    kernel = functools.partial(_harmonic_kernel, freqs=freqs,
                               include_input=include_input, logspace=logspace)

    out = pl.pallas_call(
        kernel,
        out_shape=jax.ShapeDtypeStruct((out_dim, n_blk, LANES), jnp.float32),
        grid=grid,
        in_specs=[pl.BlockSpec((c_dim, tile_r, LANES), lambda i: (0, i, 0))],
        out_specs=pl.BlockSpec((out_dim, tile_r, LANES), lambda i: (0, i, 0)),
        compiler_params=pltpu.CompilerParams(
            dimension_semantics=("parallel",)),
    )(pts_f)

    # One XLA transpose back to point-major layout.
    # TODO(synk): fuse this transpose into the consumer (free if the embedding
    # feeds a matmul that can read the feature-major layout directly).
    out = out.reshape(out_dim, n_pad)[:, :n].T
    return out.reshape(*batch, out_dim)


def harmonic_embedding_ref(x, *, n_harmonic_functions=6, omega0=1.0,
                           logspace=True, include_input=True):
    x = jnp.asarray(x, jnp.float32)
    if logspace:
        freqs = omega0 * (2.0 ** jnp.arange(n_harmonic_functions,
                                            dtype=jnp.float32))
    else:
        freqs = omega0 * jnp.linspace(1.0, 2.0 ** (n_harmonic_functions - 1),
                                      n_harmonic_functions, dtype=jnp.float32)
    embed = (x[..., None] * freqs).reshape(*x.shape[:-1], -1)
    parts = [jnp.sin(embed), jnp.cos(embed)]
    if include_input:
        parts.append(x)
    return jnp.concatenate(parts, axis=-1)


if __name__ == "__main__":
    key = jax.random.PRNGKey(0)

    # Batch of 3-D points: (2, 16, 8, 3) -> N = 256 points, out_dim = 39.
    x = jax.random.normal(key, (2, 16, 8, 3), dtype=jnp.float32)

    out = jax.block_until_ready(harmonic_embedding(x))
    ref = harmonic_embedding_ref(x)
    assert out.shape == (2, 16, 8, 39), out.shape
    # 5e-4 tolerance covers the ~1e-5 drift of the double-angle recurrence
    # plus the reference's own argument-reduction error at large angles.
    max_err = float(jnp.max(jnp.abs(out - ref)))
    assert max_err < 5e-4, max_err

    # Exercise the linspace / no-include-input path (direct sin/cos).
    out2 = jax.block_until_ready(
        harmonic_embedding(x, n_harmonic_functions=4, omega0=2.0,
                           logspace=False, include_input=False))
    ref2 = harmonic_embedding_ref(x, n_harmonic_functions=4, omega0=2.0,
                                  logspace=False, include_input=False)
    assert out2.shape == (2, 16, 8, 24), out2.shape
    max_err2 = float(jnp.max(jnp.abs(out2 - ref2)))
    assert max_err2 < 1e-4, max_err2

    print("KERNEL_OK")
</pallas_src>

<mosaic_0001>
module attributes {stable_mosaic.version = 11 : i64} {
  func.func @_harmonic_kernel(%arg0: i32, %arg1: memref<3x2x128xf32, #tpu.memory_space<vmem>>, %arg2: memref<39x2x128xf32, #tpu.memory_space<vmem>>) attributes {dimension_semantics = [#tpu.dimension_semantics<parallel>], iteration_bounds = array<i64: 1>, scalar_prefetch = 0 : i64, scratch_operands = 0 : i64, tpu.core_type = #tpu.core_type<tc>, window_params = [{transform_indices = @transform_0, window_bounds = array<i64: 3, 2, 128>}, {transform_indices = @transform_1, window_bounds = array<i64: 39, 2, 128>}]} {
    %c0 = arith.constant 0 : index
    %c0_0 = arith.constant 0 : index
    %c0_1 = arith.constant 0 : index
    %0 = vector.load %arg1[%c0, %c0_0, %c0_1] : memref<3x2x128xf32, #tpu.memory_space<vmem>>, vector<1x2x128xf32>
    %1 = vector.shape_cast %0 : vector<1x2x128xf32> to vector<2x128xf32>
    %cst = arith.constant 1.000000e+00 : f32
    %2 = vector.broadcast %cst : f32 to vector<2x128xf32>
    %3 = arith.mulf %1, %2 : vector<2x128xf32>
    %4 = math.sin %3 : vector<2x128xf32>
    %5 = math.cos %3 : vector<2x128xf32>
    %c0_2 = arith.constant 0 : index
    %c0_3 = arith.constant 0 : index
    %c0_4 = arith.constant 0 : index
    %6 = vector.load %arg2[%c0_2, %c0_3, %c0_4] : memref<39x2x128xf32, #tpu.memory_space<vmem>>, vector<1x2x128xf32>
    %7 = vector.shape_cast %6 : vector<1x2x128xf32> to vector<2x128xf32>
    %8 = vector.shape_cast %4 : vector<2x128xf32> to vector<1x2x128xf32>
    tpu.vector_store %arg2[%c0_2, %c0_3, %c0_4], %8 {strides = array<i32>} : memref<39x2x128xf32, #tpu.memory_space<vmem>>, vector<1x2x128xf32>,
    %c18 = arith.constant 18 : index
    %c0_5 = arith.constant 0 : index
    %c0_6 = arith.constant 0 : index
    %9 = vector.load %arg2[%c18, %c0_5, %c0_6] : memref<39x2x128xf32, #tpu.memory_space<vmem>>, vector<1x2x128xf32>
    %10 = vector.shape_cast %9 : vector<1x2x128xf32> to vector<2x128xf32>
    %11 = vector.shape_cast %5 : vector<2x128xf32> to vector<1x2x128xf32>
    tpu.vector_store %arg2[%c18, %c0_5, %c0_6], %11 {strides = array<i32>} : memref<39x2x128xf32, #tpu.memory_space<vmem>>, vector<1x2x128xf32>,
    %cst_7 = arith.constant 2.000000e+00 : f32
    %12 = vector.broadcast %cst_7 : f32 to vector<2x128xf32>
    %13 = arith.mulf %12, %4 : vector<2x128xf32>
    %14 = arith.mulf %13, %5 : vector<2x128xf32>
    %cst_8 = arith.constant 2.000000e+00 : f32
    %15 = vector.broadcast %cst_8 : f32 to vector<2x128xf32>
    %16 = arith.mulf %15, %4 : vector<2x128xf32>
    %17 = arith.mulf %16, %4 : vector<2x128xf32>
    %cst_9 = arith.constant 1.000000e+00 : f32
    %18 = vector.broadcast %cst_9 : f32 to vector<2x128xf32>
    %19 = arith.subf %18, %17 : vector<2x128xf32>
    %c1 = arith.constant 1 : index
    %c0_10 = arith.constant 0 : index
    %c0_11 = arith.constant 0 : index
    %20 = vector.load %arg2[%c1, %c0_10, %c0_11] : memref<39x2x128xf32, #tpu.memory_space<vmem>>, vector<1x2x128xf32>
    %21 = vector.shape_cast %20 : vector<1x2x128xf32> to vector<2x128xf32>
    %22 = vector.shape_cast %14 : vector<2x128xf32> to vector<1x2x128xf32>
    tpu.vector_store %arg2[%c1, %c0_10, %c0_11], %22 {strides = array<i32>} : memref<39x2x128xf32, #tpu.memory_space<vmem>>, vector<1x2x128xf32>,
    %c19 = arith.constant 19 : index
    %c0_12 = arith.constant 0 : index
    %c0_13 = arith.constant 0 : index
    %23 = vector.load %arg2[%c19, %c0_12, %c0_13] : memref<39x2x128xf32, #tpu.memory_space<vmem>>, vector<1x2x128xf32>
    %24 = vector.shape_cast %23 : vector<1x2x128xf32> to vector<2x128xf32>
    %25 = vector.shape_cast %19 : vector<2x128xf32> to vector<1x2x128xf32>
    tpu.vector_store %arg2[%c19, %c0_12, %c0_13], %25 {strides = array<i32>} : memref<39x2x128xf32, #tpu.memory_space<vmem>>, vector<1x2x128xf32>,
    %cst_14 = arith.constant 2.000000e+00 : f32
    %26 = vector.broadcast %cst_14 : f32 to vector<2x128xf32>
    %27 = arith.mulf %26, %14 : vector<2x128xf32>
    %28 = arith.mulf %27, %19 : vector<2x128xf32>
    %cst_15 = arith.constant 2.000000e+00 : f32
    %29 = vector.broadcast %cst_15 : f32 to vector<2x128xf32>
    %30 = arith.mulf %29, %14 : vector<2x128xf32>
    %31 = arith.mulf %30, %14 : vector<2x128xf32>
    %cst_16 = arith.constant 1.000000e+00 : f32
    %32 = vector.broadcast %cst_16 : f32 to vector<2x128xf32>
    %33 = arith.subf %32, %31 : vector<2x128xf32>
    %c2 = arith.constant 2 : index
    %c0_17 = arith.constant 0 : index
    %c0_18 = arith.constant 0 : index
    %34 = vector.load %arg2[%c2, %c0_17, %c0_18] : memref<39x2x128xf32, #tpu.memory_space<vmem>>, vector<1x2x128xf32>
    %35 = vector.shape_cast %34 : vector<1x2x128xf32> to vector<2x128xf32>
    %36 = vector.shape_cast %28 : vector<2x128xf32> to vector<1x2x128xf32>
    tpu.vector_store %arg2[%c2, %c0_17, %c0_18], %36 {strides = array<i32>} : memref<39x2x128xf32, #tpu.memory_space<vmem>>, vector<1x2x128xf32>,
    %c20 = arith.constant 20 : index
    %c0_19 = arith.constant 0 : index
    %c0_20 = arith.constant 0 : index
    %37 = vector.load %arg2[%c20, %c0_19, %c0_20] : memref<39x2x128xf32, #tpu.memory_space<vmem>>, vector<1x2x128xf32>
    %38 = vector.shape_cast %37 : vector<1x2x128xf32> to vector<2x128xf32>
    %39 = vector.shape_cast %33 : vector<2x128xf32> to vector<1x2x128xf32>
    tpu.vector_store %arg2[%c20, %c0_19, %c0_20], %39 {strides = array<i32>} : memref<39x2x128xf32, #tpu.memory_space<vmem>>, vector<1x2x128xf32>,
    %cst_21 = arith.constant 2.000000e+00 : f32
    %40 = vector.broadcast %cst_21 : f32 to vector<2x128xf32>
    %41 = arith.mulf %40, %28 : vector<2x128xf32>
    %42 = arith.mulf %41, %33 : vector<2x128xf32>
    %cst_22 = arith.constant 2.000000e+00 : f32
    %43 = vector.broadcast %cst_22 : f32 to vector<2x128xf32>
    %44 = arith.mulf %43, %28 : vector<2x128xf32>
    %45 = arith.mulf %44, %28 : vector<2x128xf32>
    %cst_23 = arith.constant 1.000000e+00 : f32
    %46 = vector.broadcast %cst_23 : f32 to vector<2x128xf32>
    %47 = arith.subf %46, %45 : vector<2x128xf32>
    %c3 = arith.constant 3 : index
    %c0_24 = arith.constant 0 : index
    %c0_25 = arith.constant 0 : index
    %48 = vector.load %arg2[%c3, %c0_24, %c0_25] : memref<39x2x128xf32, #tpu.memory_space<vmem>>, vector<1x2x128xf32>
    %49 = vector.shape_cast %48 : vector<1x2x128xf32> to vector<2x128xf32>
    %50 = vector.shape_cast %42 : vector<2x128xf32> to vector<1x2x128xf32>
    tpu.vector_store %arg2[%c3, %c0_24, %c0_25], %50 {strides = array<i32>} : memref<39x2x128xf32, #tpu.memory_space<vmem>>, vector<1x2x128xf32>,
    %c21 = arith.constant 21 : index
    %c0_26 = arith.constant 0 : index
    %c0_27 = arith.constant 0 : index
    %51 = vector.load %arg2[%c21, %c0_26, %c0_27] : memref<39x2x128xf32, #tpu.memory_space<vmem>>, vector<1x2x128xf32>
    %52 = vector.shape_cast %51 : vector<1x2x128xf32> to vector<2x128xf32>
    %53 = vector.shape_cast %47 : vector<2x128xf32> to vector<1x2x128xf32>
    tpu.vector_store %arg2[%c21, %c0_26, %c0_27], %53 {strides = array<i32>} : memref<39x2x128xf32, #tpu.memory_space<vmem>>, vector<1x2x128xf32>,
    %cst_28 = arith.constant 2.000000e+00 : f32
    %54 = vector.broadcast %cst_28 : f32 to vector<2x128xf32>
    %55 = arith.mulf %54, %42 : vector<2x128xf32>
    %56 = arith.mulf %55, %47 : vector<2x128xf32>
    %cst_29 = arith.constant 2.000000e+00 : f32
    %57 = vector.broadcast %cst_29 : f32 to vector<2x128xf32>
    %58 = arith.mulf %57, %42 : vector<2x128xf32>
    %59 = arith.mulf %58, %42 : vector<2x128xf32>
    %cst_30 = arith.constant 1.000000e+00 : f32
    %60 = vector.broadcast %cst_30 : f32 to vector<2x128xf32>
    %61 = arith.subf %60, %59 : vector<2x128xf32>
    %c4 = arith.constant 4 : index
    %c0_31 = arith.constant 0 : index
    %c0_32 = arith.constant 0 : index
    %62 = vector.load %arg2[%c4, %c0_31, %c0_32] : memref<39x2x128xf32, #tpu.memory_space<vmem>>, vector<1x2x128xf32>
    %63 = vector.shape_cast %62 : vector<1x2x128xf32> to vector<2x128xf32>
    %64 = vector.shape_cast %56 : vector<2x128xf32> to vector<1x2x128xf32>
    tpu.vector_store %arg2[%c4, %c0_31, %c0_32], %64 {strides = array<i32>} : memref<39x2x128xf32, #tpu.memory_space<vmem>>, vector<1x2x128xf32>,
    %c22 = arith.constant 22 : index
    %c0_33 = arith.constant 0 : index
    %c0_34 = arith.constant 0 : index
    %65 = vector.load %arg2[%c22, %c0_33, %c0_34] : memref<39x2x128xf32, #tpu.memory_space<vmem>>, vector<1x2x128xf32>
    %66 = vector.shape_cast %65 : vector<1x2x128xf32> to vector<2x128xf32>
    %67 = vector.shape_cast %61 : vector<2x128xf32> to vector<1x2x128xf32>
    tpu.vector_store %arg2[%c22, %c0_33, %c0_34], %67 {strides = array<i32>} : memref<39x2x128xf32, #tpu.memory_space<vmem>>, vector<1x2x128xf32>,
    %cst_35 = arith.constant 2.000000e+00 : f32
    %68 = vector.broadcast %cst_35 : f32 to vector<2x128xf32>
    %69 = arith.mulf %68, %56 : vector<2x128xf32>
    %70 = arith.mulf %69, %61 : vector<2x128xf32>
    %cst_36 = arith.constant 2.000000e+00 : f32
    %71 = vector.broadcast %cst_36 : f32 to vector<2x128xf32>
    %72 = arith.mulf %71, %56 : vector<2x128xf32>
    %73 = arith.mulf %72, %56 : vector<2x128xf32>
    %cst_37 = arith.constant 1.000000e+00 : f32
    %74 = vector.broadcast %cst_37 : f32 to vector<2x128xf32>
    %75 = arith.subf %74, %73 : vector<2x128xf32>
    %c5 = arith.constant 5 : index
    %c0_38 = arith.constant 0 : index
    %c0_39 = arith.constant 0 : index
    %76 = vector.load %arg2[%c5, %c0_38, %c0_39] : memref<39x2x128xf32, #tpu.memory_space<vmem>>, vector<1x2x128xf32>
    %77 = vector.shape_cast %76 : vector<1x2x128xf32> to vector<2x128xf32>
    %78 = vector.shape_cast %70 : vector<2x128xf32> to vector<1x2x128xf32>
    tpu.vector_store %arg2[%c5, %c0_38, %c0_39], %78 {strides = array<i32>} : memref<39x2x128xf32, #tpu.memory_space<vmem>>, vector<1x2x128xf32>,
    %c23 = arith.constant 23 : index
    %c0_40 = arith.constant 0 : index
    %c0_41 = arith.constant 0 : index
    %79 = vector.load %arg2[%c23, %c0_40, %c0_41] : memref<39x2x128xf32, #tpu.memory_space<vmem>>, vector<1x2x128xf32>
    %80 = vector.shape_cast %79 : vector<1x2x128xf32> to vector<2x128xf32>
    %81 = vector.shape_cast %75 : vector<2x128xf32> to vector<1x2x128xf32>
    tpu.vector_store %arg2[%c23, %c0_40, %c0_41], %81 {strides = array<i32>} : memref<39x2x128xf32, #tpu.memory_space<vmem>>, vector<1x2x128xf32>,
    %c36 = arith.constant 36 : index
    %c0_42 = arith.constant 0 : index
    %c0_43 = arith.constant 0 : index
    %82 = vector.load %arg2[%c36, %c0_42, %c0_43] : memref<39x2x128xf32, #tpu.memory_space<vmem>>, vector<1x2x128xf32>
    %83 = vector.shape_cast %82 : vector<1x2x128xf32> to vector<2x128xf32>
    %84 = vector.shape_cast %1 : vector<2x128xf32> to vector<1x2x128xf32>
    tpu.vector_store %arg2[%c36, %c0_42, %c0_43], %84 {strides = array<i32>} : memref<39x2x128xf32, #tpu.memory_space<vmem>>, vector<1x2x128xf32>,
    %c1_44 = arith.constant 1 : index
    %c0_45 = arith.constant 0 : index
    %c0_46 = arith.constant 0 : index
    %85 = vector.load %arg1[%c1_44, %c0_45, %c0_46] : memref<3x2x128xf32, #tpu.memory_space<vmem>>, vector<1x2x128xf32>
    %86 = vector.shape_cast %85 : vector<1x2x128xf32> to vector<2x128xf32>
    %cst_47 = arith.constant 1.000000e+00 : f32
    %87 = vector.broadcast %cst_47 : f32 to vector<2x128xf32>
    %88 = arith.mulf %86, %87 : vector<2x128xf32>
    %89 = math.sin %88 : vector<2x128xf32>
    %90 = math.cos %88 : vector<2x128xf32>
    %c6 = arith.constant 6 : index
    %c0_48 = arith.constant 0 : index
    %c0_49 = arith.constant 0 : index
    %91 = vector.load %arg2[%c6, %c0_48, %c0_49] : memref<39x2x128xf32, #tpu.memory_space<vmem>>, vector<1x2x128xf32>
    %92 = vector.shape_cast %91 : vector<1x2x128xf32> to vector<2x128xf32>
    %93 = vector.shape_cast %89 : vector<2x128xf32> to vector<1x2x128xf32>
    tpu.vector_store %arg2[%c6, %c0_48, %c0_49], %93 {strides = array<i32>} : memref<39x2x128xf32, #tpu.memory_space<vmem>>, vector<1x2x128xf32>,
    %c24 = arith.constant 24 : index
    %c0_50 = arith.constant 0 : index
    %c0_51 = arith.constant 0 : index
    %94 = vector.load %arg2[%c24, %c0_50, %c0_51] : memref<39x2x128xf32, #tpu.memory_space<vmem>>, vector<1x2x128xf32>
    %95 = vector.shape_cast %94 : vector<1x2x128xf32> to vector<2x128xf32>
    %96 = vector.shape_cast %90 : vector<2x128xf32> to vector<1x2x128xf32>
    tpu.vector_store %arg2[%c24, %c0_50, %c0_51], %96 {strides = array<i32>} : memref<39x2x128xf32, #tpu.memory_space<vmem>>, vector<1x2x128xf32>,
    %cst_52 = arith.constant 2.000000e+00 : f32
    %97 = vector.broadcast %cst_52 : f32 to vector<2x128xf32>
    %98 = arith.mulf %97, %89 : vector<2x128xf32>
    %99 = arith.mulf %98, %90 : vector<2x128xf32>
    %cst_53 = arith.constant 2.000000e+00 : f32
    %100 = vector.broadcast %cst_53 : f32 to vector<2x128xf32>
    %101 = arith.mulf %100, %89 : vector<2x128xf32>
    %102 = arith.mulf %101, %89 : vector<2x128xf32>
    %cst_54 = arith.constant 1.000000e+00 : f32
    %103 = vector.broadcast %cst_54 : f32 to vector<2x128xf32>
    %104 = arith.subf %103, %102 : vector<2x128xf32>
    %c7 = arith.constant 7 : index
    %c0_55 = arith.constant 0 : index
    %c0_56 = arith.constant 0 : index
    %105 = vector.load %arg2[%c7, %c0_55, %c0_56] : memref<39x2x128xf32, #tpu.memory_space<vmem>>, vector<1x2x128xf32>
    %106 = vector.shape_cast %105 : vector<1x2x128xf32> to vector<2x128xf32>
    %107 = vector.shape_cast %99 : vector<2x128xf32> to vector<1x2x128xf32>
    tpu.vector_store %arg2[%c7, %c0_55, %c0_56], %107 {strides = array<i32>} : memref<39x2x128xf32, #tpu.memory_space<vmem>>, vector<1x2x128xf32>,
    %c25 = arith.constant 25 : index
    %c0_57 = arith.constant 0 : index
    %c0_58 = arith.constant 0 : index
    %108 = vector.load %arg2[%c25, %c0_57, %c0_58] : memref<39x2x128xf32, #tpu.memory_space<vmem>>, vector<1x2x128xf32>
    %109 = vector.shape_cast %108 : vector<1x2x128xf32> to vector<2x128xf32>
    %110 = vector.shape_cast %104 : vector<2x128xf32> to vector<1x2x128xf32>
    tpu.vector_store %arg2[%c25, %c0_57, %c0_58], %110 {strides = array<i32>} : memref<39x2x128xf32, #tpu.memory_space<vmem>>, vector<1x2x128xf32>,
    %cst_59 = arith.constant 2.000000e+00 : f32
    %111 = vector.broadcast %cst_59 : f32 to vector<2x128xf32>
    %112 = arith.mulf %111, %99 : vector<2x128xf32>
    %113 = arith.mulf %112, %104 : vector<2x128xf32>
    %cst_60 = arith.constant 2.000000e+00 : f32
    %114 = vector.broadcast %cst_60 : f32 to vector<2x128xf32>
    %115 = arith.mulf %114, %99 : vector<2x128xf32>
    %116 = arith.mulf %115, %99 : vector<2x128xf32>
    %cst_61 = arith.constant 1.000000e+00 : f32
    %117 = vector.broadcast %cst_61 : f32 to vector<2x128xf32>
    %118 = arith.subf %117, %116 : vector<2x128xf32>
    %c8 = arith.constant 8 : index
    %c0_62 = arith.constant 0 : index
    %c0_63 = arith.constant 0 : index
    %119 = vector.load %arg2[%c8, %c0_62, %c0_63] : memref<39x2x128xf32, #tpu.memory_space<vmem>>, vector<1x2x128xf32>
    %120 = vector.shape_cast %119 : vector<1x2x128xf32> to vector<2x128xf32>
    %121 = vector.shape_cast %113 : vector<2x128xf32> to vector<1x2x128xf32>
    tpu.vector_store %arg2[%c8, %c0_62, %c0_63], %121 {strides = array<i32>} : memref<39x2x128xf32, #tpu.memory_space<vmem>>, vector<1x2x128xf32>,
    %c26 = arith.constant 26 : index
    %c0_64 = arith.constant 0 : index
    %c0_65 = arith.constant 0 : index
    %122 = vector.load %arg2[%c26, %c0_64, %c0_65] : memref<39x2x128xf32, #tpu.memory_space<vmem>>, vector<1x2x128xf32>
    %123 = vector.shape_cast %122 : vector<1x2x128xf32> to vector<2x128xf32>
    %124 = vector.shape_cast %118 : vector<2x128xf32> to vector<1x2x128xf32>
    tpu.vector_store %arg2[%c26, %c0_64, %c0_65], %124 {strides = array<i32>} : memref<39x2x128xf32, #tpu.memory_space<vmem>>, vector<1x2x128xf32>,
    %cst_66 = arith.constant 2.000000e+00 : f32
    %125 = vector.broadcast %cst_66 : f32 to vector<2x128xf32>
    %126 = arith.mulf %125, %113 : vector<2x128xf32>
    %127 = arith.mulf %126, %118 : vector<2x128xf32>
    %cst_67 = arith.constant 2.000000e+00 : f32
    %128 = vector.broadcast %cst_67 : f32 to vector<2x128xf32>
    %129 = arith.mulf %128, %113 : vector<2x128xf32>
    %130 = arith.mulf %129, %113 : vector<2x128xf32>
    %cst_68 = arith.constant 1.000000e+00 : f32
    %131 = vector.broadcast %cst_68 : f32 to vector<2x128xf32>
    %132 = arith.subf %131, %130 : vector<2x128xf32>
    %c9 = arith.constant 9 : index
    %c0_69 = arith.constant 0 : index
    %c0_70 = arith.constant 0 : index
    %133 = vector.load %arg2[%c9, %c0_69, %c0_70] : memref<39x2x128xf32, #tpu.memory_space<vmem>>, vector<1x2x128xf32>
    %134 = vector.shape_cast %133 : vector<1x2x128xf32> to vector<2x128xf32>
    %135 = vector.shape_cast %127 : vector<2x128xf32> to vector<1x2x128xf32>
    tpu.vector_store %arg2[%c9, %c0_69, %c0_70], %135 {strides = array<i32>} : memref<39x2x128xf32, #tpu.memory_space<vmem>>, vector<1x2x128xf32>,
    %c27 = arith.constant 27 : index
    %c0_71 = arith.constant 0 : index
    %c0_72 = arith.constant 0 : index
    %136 = vector.load %arg2[%c27, %c0_71, %c0_72] : memref<39x2x128xf32, #tpu.memory_space<vmem>>, vector<1x2x128xf32>
    %137 = vector.shape_cast %136 : vector<1x2x128xf32> to vector<2x128xf32>
    %138 = vector.shape_cast %132 : vector<2x128xf32> to vector<1x2x128xf32>
    tpu.vector_store %arg2[%c27, %c0_71, %c0_72], %138 {strides = array<i32>} : memref<39x2x128xf32, #tpu.memory_space<vmem>>, vector<1x2x128xf32>,
    %cst_73 = arith.constant 2.000000e+00 : f32
    %139 = vector.broadcast %cst_73 : f32 to vector<2x128xf32>
    %140 = arith.mulf %139, %127 : vector<2x128xf32>
    %141 = arith.mulf %140, %132 : vector<2x128xf32>
    %cst_74 = arith.constant 2.000000e+00 : f32
    %142 = vector.broadcast %cst_74 : f32 to vector<2x128xf32>
    %143 = arith.mulf %142, %127 : vector<2x128xf32>
    %144 = arith.mulf %143, %127 : vector<2x128xf32>
    %cst_75 = arith.constant 1.000000e+00 : f32
    %145 = vector.broadcast %cst_75 : f32 to vector<2x128xf32>
    %146 = arith.subf %145, %144 : vector<2x128xf32>
    %c10 = arith.constant 10 : index
    %c0_76 = arith.constant 0 : index
    %c0_77 = arith.constant 0 : index
    %147 = vector.load %arg2[%c10, %c0_76, %c0_77] : memref<39x2x128xf32, #tpu.memory_space<vmem>>, vector<1x2x128xf32>
    %148 = vector.shape_cast %147 : vector<1x2x128xf32> to vector<2x128xf32>
    %149 = vector.shape_cast %141 : vector<2x128xf32> to vector<1x2x128xf32>
    tpu.vector_store %arg2[%c10, %c0_76, %c0_77], %149 {strides = array<i32>} : memref<39x2x128xf32, #tpu.memory_space<vmem>>, vector<1x2x128xf32>,
    %c28 = arith.constant 28 : index
    %c0_78 = arith.constant 0 : index
    %c0_79 = arith.constant 0 : index
    %150 = vector.load %arg2[%c28, %c0_78, %c0_79] : memref<39x2x128xf32, #tpu.memory_space<vmem>>, vector<1x2x128xf32>
    %151 = vector.shape_cast %150 : vector<1x2x128xf32> to vector<2x128xf32>
    %152 = vector.shape_cast %146 : vector<2x128xf32> to vector<1x2x128xf32>
    tpu.vector_store %arg2[%c28, %c0_78, %c0_79], %152 {strides = array<i32>} : memref<39x2x128xf32, #tpu.memory_space<vmem>>, vector<1x2x128xf32>,
    %cst_80 = arith.constant 2.000000e+00 : f32
    %153 = vector.broadcast %cst_80 : f32 to vector<2x128xf32>
    %154 = arith.mulf %153, %141 : vector<2x128xf32>
    %155 = arith.mulf %154, %146 : vector<2x128xf32>
    %cst_81 = arith.constant 2.000000e+00 : f32
    %156 = vector.broadcast %cst_81 : f32 to vector<2x128xf32>
    %157 = arith.mulf %156, %141 : vector<2x128xf32>
    %158 = arith.mulf %157, %141 : vector<2x128xf32>
    %cst_82 = arith.constant 1.000000e+00 : f32
    %159 = vector.broadcast %cst_82 : f32 to vector<2x128xf32>
    %160 = arith.subf %159, %158 : vector<2x128xf32>
    %c11 = arith.constant 11 : index
    %c0_83 = arith.constant 0 : index
    %c0_84 = arith.constant 0 : index
    %161 = vector.load %arg2[%c11, %c0_83, %c0_84] : memref<39x2x128xf32, #tpu.memory_space<vmem>>, vector<1x2x128xf32>
    %162 = vector.shape_cast %161 : vector<1x2x128xf32> to vector<2x128xf32>
    %163 = vector.shape_cast %155 : vector<2x128xf32> to vector<1x2x128xf32>
    tpu.vector_store %arg2[%c11, %c0_83, %c0_84], %163 {strides = array<i32>} : memref<39x2x128xf32, #tpu.memory_space<vmem>>, vector<1x2x128xf32>,
    %c29 = arith.constant 29 : index
    %c0_85 = arith.constant 0 : index
    %c0_86 = arith.constant 0 : index
    %164 = vector.load %arg2[%c29, %c0_85, %c0_86] : memref<39x2x128xf32, #tpu.memory_space<vmem>>, vector<1x2x128xf32>
    %165 = vector.shape_cast %164 : vector<1x2x128xf32> to vector<2x128xf32>
    %166 = vector.shape_cast %160 : vector<2x128xf32> to vector<1x2x128xf32>
    tpu.vector_store %arg2[%c29, %c0_85, %c0_86], %166 {strides = array<i32>} : memref<39x2x128xf32, #tpu.memory_space<vmem>>, vector<1x2x128xf32>,
    %c37 = arith.constant 37 : index
    %c0_87 = arith.constant 0 : index
    %c0_88 = arith.constant 0 : index
    %167 = vector.load %arg2[%c37, %c0_87, %c0_88] : memref<39x2x128xf32, #tpu.memory_space<vmem>>, vector<1x2x128xf32>
    %168 = vector.shape_cast %167 : vector<1x2x128xf32> to vector<2x128xf32>
    %169 = vector.shape_cast %86 : vector<2x128xf32> to vector<1x2x128xf32>
    tpu.vector_store %arg2[%c37, %c0_87, %c0_88], %169 {strides = array<i32>} : memref<39x2x128xf32, #tpu.memory_space<vmem>>, vector<1x2x128xf32>,
    %c2_89 = arith.constant 2 : index
    %c0_90 = arith.constant 0 : index
    %c0_91 = arith.constant 0 : index
    %170 = vector.load %arg1[%c2_89, %c0_90, %c0_91] : memref<3x2x128xf32, #tpu.memory_space<vmem>>, vector<1x2x128xf32>
    %171 = vector.shape_cast %170 : vector<1x2x128xf32> to vector<2x128xf32>
    %cst_92 = arith.constant 1.000000e+00 : f32
    %172 = vector.broadcast %cst_92 : f32 to vector<2x128xf32>
    %173 = arith.mulf %171, %172 : vector<2x128xf32>
    %174 = math.sin %173 : vector<2x128xf32>
    %175 = math.cos %173 : vector<2x128xf32>
    %c12 = arith.constant 12 : index
    %c0_93 = arith.constant 0 : index
    %c0_94 = arith.constant 0 : index
    %176 = vector.load %arg2[%c12, %c0_93, %c0_94] : memref<39x2x128xf32, #tpu.memory_space<vmem>>, vector<1x2x128xf32>
    %177 = vector.shape_cast %176 : vector<1x2x128xf32> to vector<2x128xf32>
    %178 = vector.shape_cast %174 : vector<2x128xf32> to vector<1x2x128xf32>
    tpu.vector_store %arg2[%c12, %c0_93, %c0_94], %178 {strides = array<i32>} : memref<39x2x128xf32, #tpu.memory_space<vmem>>, vector<1x2x128xf32>,
    %c30 = arith.constant 30 : index
    %c0_95 = arith.constant 0 : index
    %c0_96 = arith.constant 0 : index
    %179 = vector.load %arg2[%c30, %c0_95, %c0_96] : memref<39x2x128xf32, #tpu.memory_space<vmem>>, vector<1x2x128xf32>
    %180 = vector.shape_cast %179 : vector<1x2x128xf32> to vector<2x128xf32>
    %181 = vector.shape_cast %175 : vector<2x128xf32> to vector<1x2x128xf32>
    tpu.vector_store %arg2[%c30, %c0_95, %c0_96], %181 {strides = array<i32>} : memref<39x2x128xf32, #tpu.memory_space<vmem>>, vector<1x2x128xf32>,
    %cst_97 = arith.constant 2.000000e+00 : f32
    %182 = vector.broadcast %cst_97 : f32 to vector<2x128xf32>
    %183 = arith.mulf %182, %174 : vector<2x128xf32>
    %184 = arith.mulf %183, %175 : vector<2x128xf32>
    %cst_98 = arith.constant 2.000000e+00 : f32
    %185 = vector.broadcast %cst_98 : f32 to vector<2x128xf32>
    %186 = arith.mulf %185, %174 : vector<2x128xf32>
    %187 = arith.mulf %186, %174 : vector<2x128xf32>
    %cst_99 = arith.constant 1.000000e+00 : f32
    %188 = vector.broadcast %cst_99 : f32 to vector<2x128xf32>
    %189 = arith.subf %188, %187 : vector<2x128xf32>
    %c13 = arith.constant 13 : index
    %c0_100 = arith.constant 0 : index
    %c0_101 = arith.constant 0 : index
    %190 = vector.load %arg2[%c13, %c0_100, %c0_101] : memref<39x2x128xf32, #tpu.memory_space<vmem>>, vector<1x2x128xf32>
    %191 = vector.shape_cast %190 : vector<1x2x128xf32> to vector<2x128xf32>
    %192 = vector.shape_cast %184 : vector<2x128xf32> to vector<1x2x128xf32>
    tpu.vector_store %arg2[%c13, %c0_100, %c0_101], %192 {strides = array<i32>} : memref<39x2x128xf32, #tpu.memory_space<vmem>>, vector<1x2x128xf32>,
    %c31 = arith.constant 31 : index
    %c0_102 = arith.constant 0 : index
    %c0_103 = arith.constant 0 : index
    %193 = vector.load %arg2[%c31, %c0_102, %c0_103] : memref<39x2x128xf32, #tpu.memory_space<vmem>>, vector<1x2x128xf32>
    %194 = vector.shape_cast %193 : vector<1x2x128xf32> to vector<2x128xf32>
    %195 = vector.shape_cast %189 : vector<2x128xf32> to vector<1x2x128xf32>
    tpu.vector_store %arg2[%c31, %c0_102, %c0_103], %195 {strides = array<i32>} : memref<39x2x128xf32, #tpu.memory_space<vmem>>, vector<1x2x128xf32>,
    %cst_104 = arith.constant 2.000000e+00 : f32
    %196 = vector.broadcast %cst_104 : f32 to vector<2x128xf32>
    %197 = arith.mulf %196, %184 : vector<2x128xf32>
    %198 = arith.mulf %197, %189 : vector<2x128xf32>
    %cst_105 = arith.constant 2.000000e+00 : f32
    %199 = vector.broadcast %cst_105 : f32 to vector<2x128xf32>
    %200 = arith.mulf %199, %184 : vector<2x128xf32>
    %201 = arith.mulf %200, %184 : vector<2x128xf32>
    %cst_106 = arith.constant 1.000000e+00 : f32
    %202 = vector.broadcast %cst_106 : f32 to vector<2x128xf32>
    %203 = arith.subf %202, %201 : vector<2x128xf32>
    %c14 = arith.constant 14 : index
    %c0_107 = arith.constant 0 : index
    %c0_108 = arith.constant 0 : index
    %204 = vector.load %arg2[%c14, %c0_107, %c0_108] : memref<39x2x128xf32, #tpu.memory_space<vmem>>, vector<1x2x128xf32>
    %205 = vector.shape_cast %204 : vector<1x2x128xf32> to vector<2x128xf32>
    %206 = vector.shape_cast %198 : vector<2x128xf32> to vector<1x2x128xf32>
    tpu.vector_store %arg2[%c14, %c0_107, %c0_108], %206 {strides = array<i32>} : memref<39x2x128xf32, #tpu.memory_space<vmem>>, vector<1x2x128xf32>,
    %c32 = arith.constant 32 : index
    %c0_109 = arith.constant 0 : index
    %c0_110 = arith.constant 0 : index
    %207 = vector.load %arg2[%c32, %c0_109, %c0_110] : memref<39x2x128xf32, #tpu.memory_space<vmem>>, vector<1x2x128xf32>
    %208 = vector.shape_cast %207 : vector<1x2x128xf32> to vector<2x128xf32>
    %209 = vector.shape_cast %203 : vector<2x128xf32> to vector<1x2x128xf32>
    tpu.vector_store %arg2[%c32, %c0_109, %c0_110], %209 {strides = array<i32>} : memref<39x2x128xf32, #tpu.memory_space<vmem>>, vector<1x2x128xf32>,
    %cst_111 = arith.constant 2.000000e+00 : f32
    %210 = vector.broadcast %cst_111 : f32 to vector<2x128xf32>
    %211 = arith.mulf %210, %198 : vector<2x128xf32>
    %212 = arith.mulf %211, %203 : vector<2x128xf32>
    %cst_112 = arith.constant 2.000000e+00 : f32
    %213 = vector.broadcast %cst_112 : f32 to vector<2x128xf32>
    %214 = arith.mulf %213, %198 : vector<2x128xf32>
    %215 = arith.mulf %214, %198 : vector<2x128xf32>
    %cst_113 = arith.constant 1.000000e+00 : f32
    %216 = vector.broadcast %cst_113 : f32 to vector<2x128xf32>
    %217 = arith.subf %216, %215 : vector<2x128xf32>
    %c15 = arith.constant 15 : index
    %c0_114 = arith.constant 0 : index
    %c0_115 = arith.constant 0 : index
    %218 = vector.load %arg2[%c15, %c0_114, %c0_115] : memref<39x2x128xf32, #tpu.memory_space<vmem>>, vector<1x2x128xf32>
    %219 = vector.shape_cast %218 : vector<1x2x128xf32> to vector<2x128xf32>
    %220 = vector.shape_cast %212 : vector<2x128xf32> to vector<1x2x128xf32>
    tpu.vector_store %arg2[%c15, %c0_114, %c0_115], %220 {strides = array<i32>} : memref<39x2x128xf32, #tpu.memory_space<vmem>>, vector<1x2x128xf32>,
    %c33 = arith.constant 33 : index
    %c0_116 = arith.constant 0 : index
    %c0_117 = arith.constant 0 : index
    %221 = vector.load %arg2[%c33, %c0_116, %c0_117] : memref<39x2x128xf32, #tpu.memory_space<vmem>>, vector<1x2x128xf32>
    %222 = vector.shape_cast %221 : vector<1x2x128xf32> to vector<2x128xf32>
    %223 = vector.shape_cast %217 : vector<2x128xf32> to vector<1x2x128xf32>
    tpu.vector_store %arg2[%c33, %c0_116, %c0_117], %223 {strides = array<i32>} : memref<39x2x128xf32, #tpu.memory_space<vmem>>, vector<1x2x128xf32>,
    %cst_118 = arith.constant 2.000000e+00 : f32
    %224 = vector.broadcast %cst_118 : f32 to vector<2x128xf32>
    %225 = arith.mulf %224, %212 : vector<2x128xf32>
    %226 = arith.mulf %225, %217 : vector<2x128xf32>
    %cst_119 = arith.constant 2.000000e+00 : f32
    %227 = vector.broadcast %cst_119 : f32 to vector<2x128xf32>
    %228 = arith.mulf %227, %212 : vector<2x128xf32>
    %229 = arith.mulf %228, %212 : vector<2x128xf32>
    %cst_120 = arith.constant 1.000000e+00 : f32
    %230 = vector.broadcast %cst_120 : f32 to vector<2x128xf32>
    %231 = arith.subf %230, %229 : vector<2x128xf32>
    %c16 = arith.constant 16 : index
    %c0_121 = arith.constant 0 : index
    %c0_122 = arith.constant 0 : index
    %232 = vector.load %arg2[%c16, %c0_121, %c0_122] : memref<39x2x128xf32, #tpu.memory_space<vmem>>, vector<1x2x128xf32>
    %233 = vector.shape_cast %232 : vector<1x2x128xf32> to vector<2x128xf32>
    %234 = vector.shape_cast %226 : vector<2x128xf32> to vector<1x2x128xf32>
    tpu.vector_store %arg2[%c16, %c0_121, %c0_122], %234 {strides = array<i32>} : memref<39x2x128xf32, #tpu.memory_space<vmem>>, vector<1x2x128xf32>,
    %c34 = arith.constant 34 : index
    %c0_123 = arith.constant 0 : index
    %c0_124 = arith.constant 0 : index
    %235 = vector.load %arg2[%c34, %c0_123, %c0_124] : memref<39x2x128xf32, #tpu.memory_space<vmem>>, vector<1x2x128xf32>
    %236 = vector.shape_cast %235 : vector<1x2x128xf32> to vector<2x128xf32>
    %237 = vector.shape_cast %231 : vector<2x128xf32> to vector<1x2x128xf32>
    tpu.vector_store %arg2[%c34, %c0_123, %c0_124], %237 {strides = array<i32>} : memref<39x2x128xf32, #tpu.memory_space<vmem>>, vector<1x2x128xf32>,
    %cst_125 = arith.constant 2.000000e+00 : f32
    %238 = vector.broadcast %cst_125 : f32 to vector<2x128xf32>
    %239 = arith.mulf %238, %226 : vector<2x128xf32>
    %240 = arith.mulf %239, %231 : vector<2x128xf32>
    %cst_126 = arith.constant 2.000000e+00 : f32
    %241 = vector.broadcast %cst_126 : f32 to vector<2x128xf32>
    %242 = arith.mulf %241, %226 : vector<2x128xf32>
    %243 = arith.mulf %242, %226 : vector<2x128xf32>
    %cst_127 = arith.constant 1.000000e+00 : f32
    %244 = vector.broadcast %cst_127 : f32 to vector<2x128xf32>
    %245 = arith.subf %244, %243 : vector<2x128xf32>
    %c17 = arith.constant 17 : index
    %c0_128 = arith.constant 0 : index
    %c0_129 = arith.constant 0 : index
    %246 = vector.load %arg2[%c17, %c0_128, %c0_129] : memref<39x2x128xf32, #tpu.memory_space<vmem>>, vector<1x2x128xf32>
    %247 = vector.shape_cast %246 : vector<1x2x128xf32> to vector<2x128xf32>
    %248 = vector.shape_cast %240 : vector<2x128xf32> to vector<1x2x128xf32>
    tpu.vector_store %arg2[%c17, %c0_128, %c0_129], %248 {strides = array<i32>} : memref<39x2x128xf32, #tpu.memory_space<vmem>>, vector<1x2x128xf32>,
    %c35 = arith.constant 35 : index
    %c0_130 = arith.constant 0 : index
    %c0_131 = arith.constant 0 : index
    %249 = vector.load %arg2[%c35, %c0_130, %c0_131] : memref<39x2x128xf32, #tpu.memory_space<vmem>>, vector<1x2x128xf32>
    %250 = vector.shape_cast %249 : vector<1x2x128xf32> to vector<2x128xf32>
    %251 = vector.shape_cast %245 : vector<2x128xf32> to vector<1x2x128xf32>
    tpu.vector_store %arg2[%c35, %c0_130, %c0_131], %251 {strides = array<i32>} : memref<39x2x128xf32, #tpu.memory_space<vmem>>, vector<1x2x128xf32>,
    %c38 = arith.constant 38 : index
    %c0_132 = arith.constant 0 : index
    %c0_133 = arith.constant 0 : index
    %252 = vector.load %arg2[%c38, %c0_132, %c0_133] : memref<39x2x128xf32, #tpu.memory_space<vmem>>, vector<1x2x128xf32>
    %253 = vector.shape_cast %252 : vector<1x2x128xf32> to vector<2x128xf32>
    %254 = vector.shape_cast %171 : vector<2x128xf32> to vector<1x2x128xf32>
    tpu.vector_store %arg2[%c38, %c0_132, %c0_133], %254 {strides = array<i32>} : memref<39x2x128xf32, #tpu.memory_space<vmem>>, vector<1x2x128xf32>,
    return
  }
  func.func @transform_0(%arg0: i32) -> (i32, i32, i32) {
    %c0_i32 = arith.constant 0 : i32
    %c0_i32_0 = arith.constant 0 : i32
    %c0_i32_1 = arith.constant 0 : i32
    return %c0_i32, %arg0, %c0_i32_0 : i32, i32, i32
  }
  func.func @transform_1(%arg0: i32) -> (i32, i32, i32) {
    %c0_i32 = arith.constant 0 : i32
    %c0_i32_0 = arith.constant 0 : i32
    %c0_i32_1 = arith.constant 0 : i32
    return %c0_i32, %arg0, %c0_i32_0 : i32, i32, i32
  }
}

</mosaic_0001>

<llo_original>
// kernel: tpu_custom_call.1
$region0: #{tpu_custom_call.1}
  #allocation0 [shape = 'u32[]', space=smem, size = 0x4, offset = 0x4, fixed_abs, tag = 'smem constant byte address 0x4 - core index']
  #allocation1 [shape = 'u32[72,128]{1,0:T(1,128)}', space=vmem, size = 0x9000, scoped, tag = 'internal scratch']
  %s0 = inlined_call_operand.hbm [shape: f32[3,2,128], index: 0, kind: input, shape index: {}]
  %s1 = inlined_call_operand.hbm [shape: f32[39,2,128], index: 1, kind: output, shape index: {}]
  %s2 = sld [smem:[#allocation0]]
  $region18: #{tpu_custom_call.1} parent=0
    _
  %s4 = ssub.s32 1, %s2
  %s5 = scalar_select 0, %s4, %s2
  $region1: #{tpu_custom_call.1} parent=0
    #allocation2 [shape = 'u8[3072]{0}', space=vmem, size = 0xc00, scoped, tag = 'input window, operand 0, single buffered']
    #allocation3 [shape = 's32[1]{0}', space=sflag, size = 0x4, scoped, tag = 'scoped memory for tpu_custom_call.1']
    #allocation4 [shape = 's32[1]{0}', space=sflag, size = 0x4, scoped, tag = 'scoped memory for tpu_custom_call.1']
    #allocation5 [shape = 'u8[39936]{0}', space=vmem, size = 0x9c00, scoped, tag = 'output window, operand 0, single buffered']
    %6 = vsyncpa [#allocation3], 0
    %7 = vsyncpa [#allocation4], 0
    // Predicated region
    $region2: #{tpu_custom_call.1} parent=1 // pred_check
      _
    $region3: #{tpu_custom_call.1} parent=1 // pred_check_branch
      %9 = sbr.rel (0) target = $region5
    $region4: #{tpu_custom_call.1} parent=1 // pred_region
      %11 = vsyncadd [#allocation3], 0
      %s12 = sshll.u32 %s0, 4
      %s13 = int_to_ptr.hbm [resolvable:$true] %s12
      %s14 = sshll.u32 [#allocation2], 4
      %s15 = int_to_ptr.vmem [resolvable:$true] %s14
      %20 = dma.hbm_to_vmem [thread:$0]  %s13, 96, %s15, [#allocation3], 32, 32, 2
    $region5: #{tpu_custom_call.1} parent=1 // pred_fallthru
      _
    // Predicated region
    $region6: #{tpu_custom_call.1} parent=1 // pred_check
      _
    $region7: #{tpu_custom_call.1} parent=1 // pred_check_branch
      %22 = sbr.rel (0) target = $region9
    $region8: #{tpu_custom_call.1} parent=1 // pred_region
      %24 = dma.done [#allocation3], 96
    $region9: #{tpu_custom_call.1} parent=1 // pred_fallthru
      _
    %v25 = vld [vmem:[#allocation2] sm:$0x3]
    %v26 = vand.u32 2147483647, %v25
    %vm27 = vcmp.le.f32.partialorder %v26, 0.7853982
    %vm28 = vcmp.lt.s32.totalorder %v25, 0
    %v29 = vand.u32 %v25, 2139095040
    %v30 = vshrl.u32 %v29, 23
    %v31 = vsub.s32 %v30, 127
    %v32 = vand.u32 2147483647, %v25
    %v33 = vand.u32 %v32, 8388607
    %v34 = vor.u32 %v33, 8388608
    %v35 = vsub.s32 0, %v34
    %v36 = vadd.s32 %v31, 1
    %vm37 = vcmp.gt.s32.totalorder %v36, 0
    %v38 = vsel %vm37, %v36, 0
    %v39 = vshrl.u32 %v38, 5
    %v40 = vand.u32 %v38, 31
    %v41 = vsub.s32 32, %v40
    %v42 = vshrl.u32 683565275, %v41
    %v43 = vshll.u32 683565275, %v40
    %v44 = vshrl.u32 2475754826, %v41
    %v45 = vor.u32 %v43, %v44
    %v46 = vshll.u32 2475754826, %v40
    %v47 = vshrl.u32 2131351028, %v41
    %v48 = vor.u32 %v46, %v47
    %v49 = vshll.u32 2131351028, %v40
    %v50 = vshrl.u32 2102212464, %v41
    %v51 = vor.u32 %v49, %v50
    %v52 = vshll.u32 2102212464, %v40
    %v53 = vshrl.u32 920167782, %v41
    %v54 = vor.u32 %v52, %v53
    %v55 = vshll.u32 920167782, %v40
    %v56 = vshrl.u32 1326507024, %v41
    %v57 = vor.u32 %v55, %v56
    %vm58 = vcmp.lt.s32.totalorder %v39, 1
    %vm59 = vcmp.lt.s32.totalorder %v39, 2
    %vm60 = vcmp.lt.s32.totalorder %v39, 3
    %vm61 = vcmp.lt.s32.totalorder %v39, 4
    %v62 = vsel %vm58, %v42, %v45
    %v63 = vsel %vm61, %v51, 2102212464
    %v64 = vsel %vm60, %v48, %v63
    %v65 = vsel %vm59, %v62, %v64
    %v66 = vsel %vm58, %v45, %v48
    %v67 = vsel %vm61, %v54, 920167782
    %v68 = vsel %vm60, %v51, %v67
    %v69 = vsel %vm59, %v66, %v68
    %v70 = vsel %vm58, %v48, %v51
    %v71 = vsel %vm61, %v57, 1326507024
    %v72 = vsel %vm60, %v54, %v71
    %v73 = vsel %vm59, %v70, %v72
    %v74 = vshll.u32 %v34, 8
    %v75 = vand.u32 %v74, 65535
    %v76 = vshrl.u32 %v74, 16
    %v77 = vand.u32 %v73, 65535
    %v78 = vshrl.u32 %v73, 16
    %v79 = vmul.u32 %v75, %v77
    %v80 = vmul.u32 %v75, %v78
    %v81 = vmul.u32 %v76, %v77
    %v82 = vmul.u32 %v76, %v78
    %v83 = vshll.u32 %v80, 16
    %v84 = vshrl.u32 %v80, 16
    %v85 = vshll.u32 %v81, 16
    %v86 = vshrl.u32 %v81, 16
    %vm87 = vc.u32 %v79, %v83
    %v88 = vsel %vm87, 1, 0
    %v89 = vadd.s32 %v79, %v83
    %v90 = vadd.s32 %v82, %v88
    %vm91 = vc.u32 %v89, %v85
    %v92 = vsel %vm91, 1, 0
    %v93 = vadd.s32 %v89, %v85
    %v94 = vadd.s32 %v90, %v92
    %v95 = vadd.s32 %v94, %v84
    %v96 = vadd.s32 %v95, %v86
    %v97 = vand.u32 %v74, 65535
    %v98 = vshrl.u32 %v74, 16
    %v99 = vand.u32 %v69, 65535
    %v100 = vshrl.u32 %v69, 16
    %v101 = vmul.u32 %v97, %v99
    %v102 = vmul.u32 %v97, %v100
    %v103 = vmul.u32 %v98, %v99
    %v104 = vmul.u32 %v98, %v100
    %v105 = vshll.u32 %v102, 16
    %v106 = vshrl.u32 %v102, 16
    %v107 = vshll.u32 %v103, 16
    %v108 = vshrl.u32 %v103, 16
    %vm109 = vc.u32 %v101, %v105
    %v110 = vsel %vm109, 1, 0
    %v111 = vadd.s32 %v101, %v105
    %v112 = vadd.s32 %v104, %v110
    %vm113 = vc.u32 %v111, %v107
    %v114 = vsel %vm113, 1, 0
    %v115 = vadd.s32 %v111, %v107
    %v116 = vadd.s32 %v112, %v114
    %v117 = vadd.s32 %v116, %v106
    %v118 = vadd.s32 %v117, %v108
    %v119 = vmul.u32 %v74, %v65
    %v120 = vadd.s32 %v96, %v115
    %vm121 = vc.u32 %v96, %v115
    %v122 = vadd.s32 %v118, 1
    %v123 = vsel %vm121, %v122, %v118
    %v124 = vadd.s32 %v119, %v123
    %v125 = vadd.s32 %v124, 536870912
    %v126 = vshrl.u32 %v125, 30
    %v127 = vshll.u32 %v126, 30
    %v128 = vsub.s32 %v124, %v127
    %vm129 = vcmp.lt.s32.totalorder %v128, 0
    %v130 = vsub.s32 0, %v128
    %v131 = vsel %vm129, %v130, %v128
    %v132 = vclz %v131
    %v133 = vsub.s32 %v132, 2
    %vm134 = vcmp.gt.s32.totalorder 0, %v133
    %v135 = vsel %vm134, 0, %v133
    %v136 = vsub.s32 32, %v135
    %v137 = vshll.u32 %v128, %v135
    %v138 = vshrl.u32 %v120, %v136
    %v139 = vor.u32 %v137, %v138
    %v140 = vsub.s32 4294967266, %v135
    %v141 = vadd.s32 %v140, 127
    %v142 = vshll.u32 %v141, 23
    %v143 = vor.u32 4788187, %v142
    %v144 = vand.u32 2147483647, %v143
    %v146 = vcvt.s32.f32 %v139
    %v147 = vmul.f32 %v146, %v144
    %v148 = vxor.u32 %v147, 2147483648
    %v149 = vsel %vm28, %v148, %v147
    %v150 = vsub.s32 4, %v126
    %v151 = vsel %vm28, %v150, %v126
    %v152 = vsel %vm27, %v25, %v149
    %v153 = vsel %vm27, 0, %v151
    %v154 = vmul.f32 %v152, %v152
    %v155 = vmul.f32 %v154, -0.001358992
    %v156 = vadd.f32 %v155, 0.041655596
    %v157 = vmul.f32 %v154, %v156
    %v158 = vadd.f32 %v157, -0.4999988
    %v159 = vmul.f32 %v154, %v158
    %v160 = vadd.f32 1.0, %v159
    %v161 = vmul.f32 %v152, %v152
    %v162 = vmul.f32 %v161, -0.00019511016
    %v163 = vadd.f32 %v162, 0.008332121
    %v164 = vmul.f32 %v161, %v163
    %v165 = vadd.f32 %v164, -0.16666654
    %v166 = vmul.f32 %v161, %v165
    %v167 = vadd.f32 %v166, 1.0
    %v168 = vmul.f32 %v167, %v152
    %vm169 = vweird.f32 %v25
    %v170 = vadd.s32 %v153, 3
    %v171 = vand.u32 %v170, 3
    %vm172 = vcmp.lt.s32.totalorder %v171, 2
    %vm173 = vcmp.eq.s32.totalorder %v171, 0
    %v174 = vxor.u32 %v168, 2147483648
    %v175 = vsel %vm173, %v160, %v174
    %vm176 = vcmp.eq.s32.totalorder %v171, 2
    %v177 = vxor.u32 %v160, 2147483648
    %v178 = vsel %vm176, %v177, %v168
    %v179 = vsel %vm172, %v175, %v178
    %v180 = vsel %vm169, nan, %v179
    %v181 = vand.u32 2147483647, %v25
    %vm182 = vcmp.le.f32.partialorder %v181, 0.7853982
    %vm183 = vcmp.lt.s32.totalorder %v25, 0
    %v184 = vand.u32 %v25, 2139095040
    %v185 = vshrl.u32 %v184, 23
    %v186 = vsub.s32 %v185, 127
    %v187 = vand.u32 2147483647, %v25
    %v188 = vand.u32 %v187, 8388607
    %v189 = vor.u32 %v188, 8388608
    %v190 = vsub.s32 0, %v189
    %v191 = vadd.s32 %v186, 1
    %vm192 = vcmp.gt.s32.totalorder %v191, 0
    %v193 = vsel %vm192, %v191, 0
    %v194 = vshrl.u32 %v193, 5
    %v195 = vand.u32 %v193, 31
    %v196 = vsub.s32 32, %v195
    %v197 = vshrl.u32 683565275, %v196
    %v198 = vshll.u32 683565275, %v195
    %v199 = vshrl.u32 2475754826, %v196
    %v200 = vor.u32 %v198, %v199
    %v201 = vshll.u32 2475754826, %v195
    %v202 = vshrl.u32 2131351028, %v196
    %v203 = vor.u32 %v201, %v202
    %v204 = vshll.u32 2131351028, %v195
    %v205 = vshrl.u32 2102212464, %v196
    %v206 = vor.u32 %v204, %v205
    %v207 = vshll.u32 2102212464, %v195
    %v208 = vshrl.u32 920167782, %v196
    %v209 = vor.u32 %v207, %v208
    %v210 = vshll.u32 920167782, %v195
    %v211 = vshrl.u32 1326507024, %v196
    %v212 = vor.u32 %v210, %v211
    %vm213 = vcmp.lt.s32.totalorder %v194, 1
    %vm214 = vcmp.lt.s32.totalorder %v194, 2
    %vm215 = vcmp.lt.s32.totalorder %v194, 3
    %vm216 = vcmp.lt.s32.totalorder %v194, 4
    %v217 = vsel %vm213, %v197, %v200
    %v218 = vsel %vm216, %v206, 2102212464
    %v219 = vsel %vm215, %v203, %v218
    %v220 = vsel %vm214, %v217, %v219
    %v221 = vsel %vm213, %v200, %v203
    %v222 = vsel %vm216, %v209, 920167782
    %v223 = vsel %vm215, %v206, %v222
    %v224 = vsel %vm214, %v221, %v223
    %v225 = vsel %vm213, %v203, %v206
    %v226 = vsel %vm216, %v212, 1326507024
    %v227 = vsel %vm215, %v209, %v226
    %v228 = vsel %vm214, %v225, %v227
    %v229 = vshll.u32 %v189, 8
    %v230 = vand.u32 %v229, 65535
    %v231 = vshrl.u32 %v229, 16
    %v232 = vand.u32 %v228, 65535
    %v233 = vshrl.u32 %v228, 16
    %v234 = vmul.u32 %v230, %v232
    %v235 = vmul.u32 %v230, %v233
    %v236 = vmul.u32 %v231, %v232
    %v237 = vmul.u32 %v231, %v233
    %v238 = vshll.u32 %v235, 16
    %v239 = vshrl.u32 %v235, 16
    %v240 = vshll.u32 %v236, 16
    %v241 = vshrl.u32 %v236, 16
    %vm242 = vc.u32 %v234, %v238
    %v243 = vsel %vm242, 1, 0
    %v244 = vadd.s32 %v234, %v238
    %v245 = vadd.s32 %v237, %v243
    %vm246 = vc.u32 %v244, %v240
    %v247 = vsel %vm246, 1, 0
    %v248 = vadd.s32 %v244, %v240
    %v249 = vadd.s32 %v245, %v247
    %v250 = vadd.s32 %v249, %v239
    %v251 = vadd.s32 %v250, %v241
    %v252 = vand.u32 %v229, 65535
    %v253 = vshrl.u32 %v229, 16
    %v254 = vand.u32 %v224, 65535
    %v255 = vshrl.u32 %v224, 16
    %v256 = vmul.u32 %v252, %v254
    %v257 = vmul.u32 %v252, %v255
    %v258 = vmul.u32 %v253, %v254
    %v259 = vmul.u32 %v253, %v255
    %v260 = vshll.u32 %v257, 16
    %v261 = vshrl.u32 %v257, 16
    %v262 = vshll.u32 %v258, 16
    %v263 = vshrl.u32 %v258, 16
    %vm264 = vc.u32 %v256, %v260
    %v265 = vsel %vm264, 1, 0
    %v266 = vadd.s32 %v256, %v260
    %v267 = vadd.s32 %v259, %v265
    %vm268 = vc.u32 %v266, %v262
    %v269 = vsel %vm268, 1, 0
    %v270 = vadd.s32 %v266, %v262
    %v271 = vadd.s32 %v267, %v269
    %v272 = vadd.s32 %v271, %v261
    %v273 = vadd.s32 %v272, %v263
    %v274 = vmul.u32 %v229, %v220
    %v275 = vadd.s32 %v251, %v270
    %vm276 = vc.u32 %v251, %v270
    %v277 = vadd.s32 %v273, 1
    %v278 = vsel %vm276, %v277, %v273
    %v279 = vadd.s32 %v274, %v278
    %v280 = vadd.s32 %v279, 536870912
    %v281 = vshrl.u32 %v280, 30
    %v282 = vshll.u32 %v281, 30
    %v283 = vsub.s32 %v279, %v282
    %vm284 = vcmp.lt.s32.totalorder %v283, 0
    %v285 = vsub.s32 0, %v283
    %v286 = vsel %vm284, %v285, %v283
    %v287 = vclz %v286
    %v288 = vsub.s32 %v287, 2
    %vm289 = vcmp.gt.s32.totalorder 0, %v288
    %v290 = vsel %vm289, 0, %v288
    %v291 = vsub.s32 32, %v290
    %v292 = vshll.u32 %v283, %v290
    %v293 = vshrl.u32 %v275, %v291
    %v294 = vor.u32 %v292, %v293
    %v295 = vsub.s32 4294967266, %v290
    %v296 = vadd.s32 %v295, 127
    %v297 = vshll.u32 %v296, 23
    %v298 = vor.u32 4788187, %v297
    %v299 = vand.u32 2147483647, %v298
    %v301 = vcvt.s32.f32 %v294
    %v302 = vmul.f32 %v301, %v299
    %v303 = vxor.u32 %v302, 2147483648
    %v304 = vsel %vm183, %v303, %v302
    %v305 = vsub.s32 4, %v281
    %v306 = vsel %vm183, %v305, %v281
    %v307 = vsel %vm182, %v25, %v304
    %v308 = vsel %vm182, 0, %v306
    %v309 = vmul.f32 %v307, %v307
    %v310 = vmul.f32 %v309, -0.001358992
    %v311 = vadd.f32 %v310, 0.041655596
    %v312 = vmul.f32 %v309, %v311
    %v313 = vadd.f32 %v312, -0.4999988
    %v314 = vmul.f32 %v309, %v313
    %v315 = vadd.f32 1.0, %v314
    %v316 = vmul.f32 %v307, %v307
    %v317 = vmul.f32 %v316, -0.00019511016
    %v318 = vadd.f32 %v317, 0.008332121
    %v319 = vmul.f32 %v316, %v318
    %v320 = vadd.f32 %v319, -0.16666654
    %v321 = vmul.f32 %v316, %v320
    %v322 = vadd.f32 %v321, 1.0
    %v323 = vmul.f32 %v322, %v307
    %vm324 = vweird.f32 %v25
    %v325 = vand.u32 %v308, 3
    %vm326 = vcmp.lt.s32.totalorder %v325, 2
    %vm327 = vcmp.eq.s32.totalorder %v325, 0
    %v328 = vxor.u32 %v323, 2147483648
    %v329 = vsel %vm327, %v315, %v328
    %vm330 = vcmp.eq.s32.totalorder %v325, 2
    %v331 = vxor.u32 %v315, 2147483648
    %v332 = vsel %vm330, %v331, %v323
    %v333 = vsel %vm326, %v329, %v332
    %v334 = vsel %vm324, nan, %v333
    %335 = vst [vmem:[#allocation5] sm:$0x3] %v180
    %s336 = scalar_lea.vmem [#allocation5], 36
    %337 = vst [vmem:[%s336] sm:$0x3] %v334
    %v338 = vmul.f32 %v180, 2.0
    %v339 = vmul.f32 %v338, %v334
    %v340 = vmul.f32 %v338, %v180
    %v341 = vsub.f32 1.0, %v340
    %s342 = scalar_lea.vmem [#allocation5], 2
    %343 = vst [vmem:[%s342] sm:$0x3] %v339
    %s344 = scalar_lea.vmem [#allocation5], 38
    %345 = vst [vmem:[%s344] sm:$0x3] %v341
    %v346 = vmul.f32 %v339, 2.0
    %v347 = vmul.f32 %v346, %v341
    %v348 = vmul.f32 %v346, %v339
    %v349 = vsub.f32 1.0, %v348
    %s350 = scalar_lea.vmem [#allocation5], 4
    %351 = vst [vmem:[%s350] sm:$0x3] %v347
    %s352 = scalar_lea.vmem [#allocation5], 40
    %353 = vst [vmem:[%s352] sm:$0x3] %v349
    %v354 = vmul.f32 %v347, 2.0
    %v355 = vmul.f32 %v354, %v349
    %v356 = vmul.f32 %v354, %v347
    %v357 = vsub.f32 1.0, %v356
    %s358 = scalar_lea.vmem [#allocation5], 6
    %359 = vst [vmem:[%s358] sm:$0x3] %v355
    %s360 = scalar_lea.vmem [#allocation5], 42
    %361 = vst [vmem:[%s360] sm:$0x3] %v357
    %v362 = vmul.f32 %v355, 2.0
    %v363 = vmul.f32 %v362, %v357
    %v364 = vmul.f32 %v362, %v355
    %v365 = vsub.f32 1.0, %v364
    %s366 = scalar_lea.vmem [#allocation5], 8
    %367 = vst [vmem:[%s366] sm:$0x3] %v363
    %s368 = scalar_lea.vmem [#allocation5], 44
    %369 = vst [vmem:[%s368] sm:$0x3] %v365
    %v370 = vmul.f32 %v363, 2.0
    %v371 = vmul.f32 %v370, %v365
    %v372 = vmul.f32 %v370, %v363
    %v373 = vsub.f32 1.0, %v372
    %s374 = scalar_lea.vmem [#allocation5], 10
    %375 = vst [vmem:[%s374] sm:$0x3] %v371
    %s376 = scalar_lea.vmem [#allocation5], 46
    %377 = vst [vmem:[%s376] sm:$0x3] %v373
    %s378 = scalar_lea.vmem [#allocation5], 72
    %379 = vst [vmem:[%s378] sm:$0x3] %v25
    %s380 = scalar_lea.vmem [#allocation2], 2
    %v381 = vld [vmem:[%s380] sm:$0x3]
    %v382 = vand.u32 2147483647, %v381
    %vm383 = vcmp.le.f32.partialorder %v382, 0.7853982
    %vm384 = vcmp.lt.s32.totalorder %v381, 0
    %v385 = vand.u32 %v381, 2139095040
    %v386 = vshrl.u32 %v385, 23
    %v387 = vsub.s32 %v386, 127
    %v388 = vand.u32 2147483647, %v381
    %v389 = vand.u32 %v388, 8388607
    %v390 = vor.u32 %v389, 8388608
    %v391 = vsub.s32 0, %v390
    %v392 = vadd.s32 %v387, 1
    %vm393 = vcmp.gt.s32.totalorder %v392, 0
    %v394 = vsel %vm393, %v392, 0
    %v395 = vshrl.u32 %v394, 5
    %v396 = vand.u32 %v394, 31
    %v397 = vsub.s32 32, %v396
    %v398 = vshrl.u32 683565275, %v397
    %v399 = vshll.u32 683565275, %v396
    %v400 = vshrl.u32 2475754826, %v397
    %v401 = vor.u32 %v399, %v400
    %v402 = vshll.u32 2475754826, %v396
    %v403 = vshrl.u32 2131351028, %v397
    %v404 = vor.u32 %v402, %v403
    %v405 = vshll.u32 2131351028, %v396
    %v406 = vshrl.u32 2102212464, %v397
    %v407 = vor.u32 %v405, %v406
    %v408 = vshll.u32 2102212464, %v396
    %v409 = vshrl.u32 920167782, %v397
    %v410 = vor.u32 %v408, %v409
    %v411 = vshll.u32 920167782, %v396
    %v412 = vshrl.u32 1326507024, %v397
    %v413 = vor.u32 %v411, %v412
    %vm414 = vcmp.lt.s32.totalorder %v395, 1
    %vm415 = vcmp.lt.s32.totalorder %v395, 2
    %vm416 = vcmp.lt.s32.totalorder %v395, 3
    %vm417 = vcmp.lt.s32.totalorder %v395, 4
    %v418 = vsel %vm414, %v398, %v401
    %v419 = vsel %vm417, %v407, 2102212464
    %v420 = vsel %vm416, %v404, %v419
    %v421 = vsel %vm415, %v418, %v420
    %v422 = vsel %vm414, %v401, %v404
    %v423 = vsel %vm417, %v410, 920167782
    %v424 = vsel %vm416, %v407, %v423
    %v425 = vsel %vm415, %v422, %v424
    %v426 = vsel %vm414, %v404, %v407
    %v427 = vsel %vm417, %v413, 1326507024
    %v428 = vsel %vm416, %v410, %v427
    %v429 = vsel %vm415, %v426, %v428
    %v430 = vshll.u32 %v390, 8
    %v431 = vand.u32 %v430, 65535
    %v432 = vshrl.u32 %v430, 16
    %v433 = vand.u32 %v429, 65535
    %v434 = vshrl.u32 %v429, 16
    %v435 = vmul.u32 %v431, %v433
    %v436 = vmul.u32 %v431, %v434
    %v437 = vmul.u32 %v432, %v433
    %v438 = vmul.u32 %v432, %v434
    %v439 = vshll.u32 %v436, 16
    %v440 = vshrl.u32 %v436, 16
    %v441 = vshll.u32 %v437, 16
    %v442 = vshrl.u32 %v437, 16
    %vm443 = vc.u32 %v435, %v439
    %v444 = vsel %vm443, 1, 0
    %v445 = vadd.s32 %v435, %v439
    %v446 = vadd.s32 %v438, %v444
    %vm447 = vc.u32 %v445, %v441
    %v448 = vsel %vm447, 1, 0
    %v449 = vadd.s32 %v445, %v441
    %v450 = vadd.s32 %v446, %v448
    %v451 = vadd.s32 %v450, %v440
    %v452 = vadd.s32 %v451, %v442
    %v453 = vand.u32 %v430, 65535
    %v454 = vshrl.u32 %v430, 16
    %v455 = vand.u32 %v425, 65535
    %v456 = vshrl.u32 %v425, 16
    %v457 = vmul.u32 %v453, %v455
    %v458 = vmul.u32 %v453, %v456
    %v459 = vmul.u32 %v454, %v455
    %v460 = vmul.u32 %v454, %v456
    %v461 = vshll.u32 %v458, 16
    %v462 = vshrl.u32 %v458, 16
    %v463 = vshll.u32 %v459, 16
    %v464 = vshrl.u32 %v459, 16
    %vm465 = vc.u32 %v457, %v461
    %v466 = vsel %vm465, 1, 0
    %v467 = vadd.s32 %v457, %v461
    %v468 = vadd.s32 %v460, %v466
    %vm469 = vc.u32 %v467, %v463
    %v470 = vsel %vm469, 1, 0
    %v471 = vadd.s32 %v467, %v463
    %v472 = vadd.s32 %v468, %v470
    %v473 = vadd.s32 %v472, %v462
    %v474 = vadd.s32 %v473, %v464
    %v475 = vmul.u32 %v430, %v421
    %v476 = vadd.s32 %v452, %v471
    %vm477 = vc.u32 %v452, %v471
    %v478 = vadd.s32 %v474, 1
    %v479 = vsel %vm477, %v478, %v474
    %v480 = vadd.s32 %v475, %v479
    %v481 = vadd.s32 %v480, 536870912
    %v482 = vshrl.u32 %v481, 30
    %v483 = vshll.u32 %v482, 30
    %v484 = vsub.s32 %v480, %v483
    %vm485 = vcmp.lt.s32.totalorder %v484, 0
    %v486 = vsub.s32 0, %v484
    %v487 = vsel %vm485, %v486, %v484
    %v488 = vclz %v487
    %v489 = vsub.s32 %v488, 2
    %vm490 = vcmp.gt.s32.totalorder 0, %v489
    %v491 = vsel %vm490, 0, %v489
    %v492 = vsub.s32 32, %v491
    %v493 = vshll.u32 %v484, %v491
    %v494 = vshrl.u32 %v476, %v492
    %v495 = vor.u32 %v493, %v494
    %v496 = vsub.s32 4294967266, %v491
    %v497 = vadd.s32 %v496, 127
    %v498 = vshll.u32 %v497, 23
    %v499 = vor.u32 4788187, %v498
    %v500 = vand.u32 2147483647, %v499
    %v502 = vcvt.s32.f32 %v495
    %v503 = vmul.f32 %v502, %v500
    %v504 = vxor.u32 %v503, 2147483648
    %v505 = vsel %vm384, %v504, %v503
    %v506 = vsub.s32 4, %v482
    %v507 = vsel %vm384, %v506, %v482
    %v508 = vsel %vm383, %v381, %v505
    %v509 = vsel %vm383, 0, %v507
    %v510 = vmul.f32 %v508, %v508
    %v511 = vmul.f32 %v510, -0.001358992
    %v512 = vadd.f32 %v511, 0.041655596
    %v513 = vmul.f32 %v510, %v512
    %v514 = vadd.f32 %v513, -0.4999988
    %v515 = vmul.f32 %v510, %v514
    %v516 = vadd.f32 1.0, %v515
    %v517 = vmul.f32 %v508, %v508
    %v518 = vmul.f32 %v517, -0.00019511016
    %v519 = vadd.f32 %v518, 0.008332121
    %v520 = vmul.f32 %v517, %v519
    %v521 = vadd.f32 %v520, -0.16666654
    %v522 = vmul.f32 %v517, %v521
    %v523 = vadd.f32 %v522, 1.0
    %v524 = vmul.f32 %v523, %v508
    %vm525 = vweird.f32 %v381
    %v526 = vadd.s32 %v509, 3
    %v527 = vand.u32 %v526, 3
    %vm528 = vcmp.lt.s32.totalorder %v527, 2
    %vm529 = vcmp.eq.s32.totalorder %v527, 0
    %v530 = vxor.u32 %v524, 2147483648
    %v531 = vsel %vm529, %v516, %v530
    %vm532 = vcmp.eq.s32.totalorder %v527, 2
    %v533 = vxor.u32 %v516, 2147483648
    %v534 = vsel %vm532, %v533, %v524
    %v535 = vsel %vm528, %v531, %v534
    %v536 = vsel %vm525, nan, %v535
    %v537 = vand.u32 2147483647, %v381
    %vm538 = vcmp.le.f32.partialorder %v537, 0.7853982
    %vm539 = vcmp.lt.s32.totalorder %v381, 0
    %v540 = vand.u32 %v381, 2139095040
    %v541 = vshrl.u32 %v540, 23
    %v542 = vsub.s32 %v541, 127
    %v543 = vand.u32 2147483647, %v381
    %v544 = vand.u32 %v543, 8388607
    %v545 = vor.u32 %v544, 8388608
    %v546 = vsub.s32 0, %v545
    %v547 = vadd.s32 %v542, 1
    %vm548 = vcmp.gt.s32.totalorder %v547, 0
    %v549 = vsel %vm548, %v547, 0
    %v550 = vshrl.u32 %v549, 5
    %v551 = vand.u32 %v549, 31
    %v552 = vsub.s32 32, %v551
    %v553 = vshrl.u32 683565275, %v552
    %v554 = vshll.u32 683565275, %v551
    %v555 = vshrl.u32 2475754826, %v552
    %v556 = vor.u32 %v554, %v555
    %v557 = vshll.u32 2475754826, %v551
    %v558 = vshrl.u32 2131351028, %v552
    %v559 = vor.u32 %v557, %v558
    %v560 = vshll.u32 2131351028, %v551
    %v561 = vshrl.u32 2102212464, %v552
    %v562 = vor.u32 %v560, %v561
    %v563 = vshll.u32 2102212464, %v551
    %v564 = vshrl.u32 920167782, %v552
    %v565 = vor.u32 %v563, %v564
    %v566 = vshll.u32 920167782, %v551
    %v567 = vshrl.u32 1326507024, %v552
    %v568 = vor.u32 %v566, %v567
    %vm569 = vcmp.lt.s32.totalorder %v550, 1
    %vm570 = vcmp.lt.s32.totalorder %v550, 2
    %vm571 = vcmp.lt.s32.totalorder %v550, 3
    %vm572 = vcmp.lt.s32.totalorder %v550, 4
    %v573 = vsel %vm569, %v553, %v556
    %v574 = vsel %vm572, %v562, 2102212464
    %v575 = vsel %vm571, %v559, %v574
    %v576 = vsel %vm570, %v573, %v575
    %v577 = vsel %vm569, %v556, %v559
    %v578 = vsel %vm572, %v565, 920167782
    %v579 = vsel %vm571, %v562, %v578
    %v580 = vsel %vm570, %v577, %v579
    %v581 = vsel %vm569, %v559, %v562
    %v582 = vsel %vm572, %v568, 1326507024
    %v583 = vsel %vm571, %v565, %v582
    %v584 = vsel %vm570, %v581, %v583
    %v585 = vshll.u32 %v545, 8
    %v586 = vand.u32 %v585, 65535
    %v587 = vshrl.u32 %v585, 16
    %v588 = vand.u32 %v584, 65535
    %v589 = vshrl.u32 %v584, 16
    %v590 = vmul.u32 %v586, %v588
    %v591 = vmul.u32 %v586, %v589
    %v592 = vmul.u32 %v587, %v588
    %v593 = vmul.u32 %v587, %v589
    %v594 = vshll.u32 %v591, 16
    %v595 = vshrl.u32 %v591, 16
    %v596 = vshll.u32 %v592, 16
    %v597 = vshrl.u32 %v592, 16
    %vm598 = vc.u32 %v590, %v594
    %v599 = vsel %vm598, 1, 0
    %v600 = vadd.s32 %v590, %v594
    %v601 = vadd.s32 %v593, %v599
    %vm602 = vc.u32 %v600, %v596
    %v603 = vsel %vm602, 1, 0
    %v604 = vadd.s32 %v600, %v596
    %v605 = vadd.s32 %v601, %v603
    %v606 = vadd.s32 %v605, %v595
    %v607 = vadd.s32 %v606, %v597
    %v608 = vand.u32 %v585, 65535
    %v609 = vshrl.u32 %v585, 16
    %v610 = vand.u32 %v580, 65535
    %v611 = vshrl.u32 %v580, 16
    %v612 = vmul.u32 %v608, %v610
    %v613 = vmul.u32 %v608, %v611
    %v614 = vmul.u32 %v609, %v610
    %v615 = vmul.u32 %v609, %v611
    %v616 = vshll.u32 %v613, 16
    %v617 = vshrl.u32 %v613, 16
    %v618 = vshll.u32 %v614, 16
    %v619 = vshrl.u32 %v614, 16
    %vm620 = vc.u32 %v612, %v616
    %v621 = vsel %vm620, 1, 0
    %v622 = vadd.s32 %v612, %v616
    %v623 = vadd.s32 %v615, %v621
    %vm624 = vc.u32 %v622, %v618
    %v625 = vsel %vm624, 1, 0
    %v626 = vadd.s32 %v622, %v618
    %v627 = vadd.s32 %v623, %v625
    %v628 = vadd.s32 %v627, %v617
    %v629 = vadd.s32 %v628, %v619
    %v630 = vmul.u32 %v585, %v576
    %v631 = vadd.s32 %v607, %v626
    %vm632 = vc.u32 %v607, %v626
    %v633 = vadd.s32 %v629, 1
    %v634 = vsel %vm632, %v633, %v629
    %v635 = vadd.s32 %v630, %v634
    %v636 = vadd.s32 %v635, 536870912
    %v637 = vshrl.u32 %v636, 30
    %v638 = vshll.u32 %v637, 30
    %v639 = vsub.s32 %v635, %v638
    %vm640 = vcmp.lt.s32.totalorder %v639, 0
    %v641 = vsub.s32 0, %v639
    %v642 = vsel %vm640, %v641, %v639
    %v643 = vclz %v642
    %v644 = vsub.s32 %v643, 2
    %vm645 = vcmp.gt.s32.totalorder 0, %v644
    %v646 = vsel %vm645, 0, %v644
    %v647 = vsub.s32 32, %v646
    %v648 = vshll.u32 %v639, %v646
    %v649 = vshrl.u32 %v631, %v647
    %v650 = vor.u32 %v648, %v649
    %v651 = vsub.s32 4294967266, %v646
    %v652 = vadd.s32 %v651, 127
    %v653 = vshll.u32 %v652, 23
    %v654 = vor.u32 4788187, %v653
    %v655 = vand.u32 2147483647, %v654
    %v657 = vcvt.s32.f32 %v650
    %v658 = vmul.f32 %v657, %v655
    %v659 = vxor.u32 %v658, 2147483648
    %v660 = vsel %vm539, %v659, %v658
    %v661 = vsub.s32 4, %v637
    %v662 = vsel %vm539, %v661, %v637
    %v663 = vsel %vm538, %v381, %v660
    %v664 = vsel %vm538, 0, %v662
    %v665 = vmul.f32 %v663, %v663
    %v666 = vmul.f32 %v665, -0.001358992
    %v667 = vadd.f32 %v666, 0.041655596
    %v668 = vmul.f32 %v665, %v667
    %v669 = vadd.f32 %v668, -0.4999988
    %v670 = vmul.f32 %v665, %v669
    %v671 = vadd.f32 1.0, %v670
    %v672 = vmul.f32 %v663, %v663
    %v673 = vmul.f32 %v672, -0.00019511016
    %v674 = vadd.f32 %v673, 0.008332121
    %v675 = vmul.f32 %v672, %v674
    %v676 = vadd.f32 %v675, -0.16666654
    %v677 = vmul.f32 %v672, %v676
    %v678 = vadd.f32 %v677, 1.0
    %v679 = vmul.f32 %v678, %v663
    %vm680 = vweird.f32 %v381
    %v681 = vand.u32 %v664, 3
    %vm682 = vcmp.lt.s32.totalorder %v681, 2
    %vm683 = vcmp.eq.s32.totalorder %v681, 0
    %v684 = vxor.u32 %v679, 2147483648
    %v685 = vsel %vm683, %v671, %v684
    %vm686 = vcmp.eq.s32.totalorder %v681, 2
    %v687 = vxor.u32 %v671, 2147483648
    %v688 = vsel %vm686, %v687, %v679
    %v689 = vsel %vm682, %v685, %v688
    %v690 = vsel %vm680, nan, %v689
    %s691 = scalar_lea.vmem [#allocation5], 12
    %692 = vst [vmem:[%s691] sm:$0x3] %v536
    %s693 = scalar_lea.vmem [#allocation5], 48
    %694 = vst [vmem:[%s693] sm:$0x3] %v690
    %v695 = vmul.f32 %v536, 2.0
    %v696 = vmul.f32 %v695, %v690
    %v697 = vmul.f32 %v695, %v536
    %v698 = vsub.f32 1.0, %v697
    %s699 = scalar_lea.vmem [#allocation5], 14
    %700 = vst [vmem:[%s699] sm:$0x3] %v696
    %s701 = scalar_lea.vmem [#allocation5], 50
    %702 = vst [vmem:[%s701] sm:$0x3] %v698
    %v703 = vmul.f32 %v696, 2.0
    %v704 = vmul.f32 %v703, %v698
    %v705 = vmul.f32 %v703, %v696
    %v706 = vsub.f32 1.0, %v705
    %s707 = scalar_lea.vmem [#allocation5], 16
    %708 = vst [vmem:[%s707] sm:$0x3] %v704
    %s709 = scalar_lea.vmem [#allocation5], 52
    %710 = vst [vmem:[%s709] sm:$0x3] %v706
    %v711 = vmul.f32 %v704, 2.0
    %v712 = vmul.f32 %v711, %v706
    %v713 = vmul.f32 %v711, %v704
    %v714 = vsub.f32 1.0, %v713
    %s715 = scalar_lea.vmem [#allocation5], 18
    %716 = vst [vmem:[%s715] sm:$0x3] %v712
    %s717 = scalar_lea.vmem [#allocation5], 54
    %718 = vst [vmem:[%s717] sm:$0x3] %v714
    %v719 = vmul.f32 %v712, 2.0
    %v720 = vmul.f32 %v719, %v714
    %v721 = vmul.f32 %v719, %v712
    %v722 = vsub.f32 1.0, %v721
    %s723 = scalar_lea.vmem [#allocation5], 20
    %724 = vst [vmem:[%s723] sm:$0x3] %v720
    %s725 = scalar_lea.vmem [#allocation5], 56
    %726 = vst [vmem:[%s725] sm:$0x3] %v722
    %v727 = vmul.f32 %v720, 2.0
    %v728 = vmul.f32 %v727, %v722
    %v729 = vmul.f32 %v727, %v720
    %v730 = vsub.f32 1.0, %v729
    %s731 = scalar_lea.vmem [#allocation5], 22
    %732 = vst [vmem:[%s731] sm:$0x3] %v728
    %s733 = scalar_lea.vmem [#allocation5], 58
    %734 = vst [vmem:[%s733] sm:$0x3] %v730
    %s735 = scalar_lea.vmem [#allocation5], 74
    %736 = vst [vmem:[%s735] sm:$0x3] %v381
    %s737 = scalar_lea.vmem [#allocation2], 4
    %v738 = vld [vmem:[%s737] sm:$0x3]
    %v739 = vand.u32 2147483647, %v738
    %vm740 = vcmp.le.f32.partialorder %v739, 0.7853982
    %vm741 = vcmp.lt.s32.totalorder %v738, 0
    %v742 = vand.u32 %v738, 2139095040
    %v743 = vshrl.u32 %v742, 23
    %v744 = vsub.s32 %v743, 127
    %v745 = vand.u32 2147483647, %v738
    %v746 = vand.u32 %v745, 8388607
    %v747 = vor.u32 %v746, 8388608
    %v748 = vsub.s32 0, %v747
    %v749 = vadd.s32 %v744, 1
    %vm750 = vcmp.gt.s32.totalorder %v749, 0
    %v751 = vsel %vm750, %v749, 0
    %v752 = vshrl.u32 %v751, 5
    %v753 = vand.u32 %v751, 31
    %v754 = vsub.s32 32, %v753
    %v755 = vshrl.u32 683565275, %v754
    %v756 = vshll.u32 683565275, %v753
    %v757 = vshrl.u32 2475754826, %v754
    %v758 = vor.u32 %v756, %v757
    %v759 = vshll.u32 2475754826, %v753
    %v760 = vshrl.u32 2131351028, %v754
    %v761 = vor.u32 %v759, %v760
    %v762 = vshll.u32 2131351028, %v753
    %v763 = vshrl.u32 2102212464, %v754
    %v764 = vor.u32 %v762, %v763
    %v765 = vshll.u32 2102212464, %v753
    %v766 = vshrl.u32 920167782, %v754
    %v767 = vor.u32 %v765, %v766
    %v768 = vshll.u32 920167782, %v753
    %v769 = vshrl.u32 1326507024, %v754
    %v770 = vor.u32 %v768, %v769
    %vm771 = vcmp.lt.s32.totalorder %v752, 1
    %vm772 = vcmp.lt.s32.totalorder %v752, 2
    %vm773 = vcmp.lt.s32.totalorder %v752, 3
    %vm774 = vcmp.lt.s32.totalorder %v752, 4
    %v775 = vsel %vm771, %v755, %v758
    %v776 = vsel %vm774, %v764, 2102212464
    %v777 = vsel %vm773, %v761, %v776
    %v778 = vsel %vm772, %v775, %v777
    %v779 = vsel %vm771, %v758, %v761
    %v780 = vsel %vm774, %v767, 920167782
    %v781 = vsel %vm773, %v764, %v780
    %v782 = vsel %vm772, %v779, %v781
    %v783 = vsel %vm771, %v761, %v764
    %v784 = vsel %vm774, %v770, 1326507024
    %v785 = vsel %vm773, %v767, %v784
    %v786 = vsel %vm772, %v783, %v785
    %v787 = vshll.u32 %v747, 8
    %v788 = vand.u32 %v787, 65535
    %v789 = vshrl.u32 %v787, 16
    %v790 = vand.u32 %v786, 65535
    %v791 = vshrl.u32 %v786, 16
    %v792 = vmul.u32 %v788, %v790
    %v793 = vmul.u32 %v788, %v791
    %v794 = vmul.u32 %v789, %v790
    %v795 = vmul.u32 %v789, %v791
    %v796 = vshll.u32 %v793, 16
    %v797 = vshrl.u32 %v793, 16
    %v798 = vshll.u32 %v794, 16
    %v799 = vshrl.u32 %v794, 16
    %vm800 = vc.u32 %v792, %v796
    %v801 = vsel %vm800, 1, 0
    %v802 = vadd.s32 %v792, %v796
    %v803 = vadd.s32 %v795, %v801
    %vm804 = vc.u32 %v802, %v798
    %v805 = vsel %vm804, 1, 0
    %v806 = vadd.s32 %v802, %v798
    %v807 = vadd.s32 %v803, %v805
    %v808 = vadd.s32 %v807, %v797
    %v809 = vadd.s32 %v808, %v799
    %v810 = vand.u32 %v787, 65535
    %v811 = vshrl.u32 %v787, 16
    %v812 = vand.u32 %v782, 65535
    %v813 = vshrl.u32 %v782, 16
    %v814 = vmul.u32 %v810, %v812
    %v815 = vmul.u32 %v810, %v813
    %v816 = vmul.u32 %v811, %v812
    %v817 = vmul.u32 %v811, %v813
    %v818 = vshll.u32 %v815, 16
    %v819 = vshrl.u32 %v815, 16
    %v820 = vshll.u32 %v816, 16
    %v821 = vshrl.u32 %v816, 16
    %vm822 = vc.u32 %v814, %v818
    %v823 = vsel %vm822, 1, 0
    %v824 = vadd.s32 %v814, %v818
    %v825 = vadd.s32 %v817, %v823
    %vm826 = vc.u32 %v824, %v820
    %v827 = vsel %vm826, 1, 0
    %v828 = vadd.s32 %v824, %v820
    %v829 = vadd.s32 %v825, %v827
    %v830 = vadd.s32 %v829, %v819
    %v831 = vadd.s32 %v830, %v821
    %v832 = vmul.u32 %v787, %v778
    %v833 = vadd.s32 %v809, %v828
    %vm834 = vc.u32 %v809, %v828
    %v835 = vadd.s32 %v831, 1
    %v836 = vsel %vm834, %v835, %v831
    %v837 = vadd.s32 %v832, %v836
    %v838 = vadd.s32 %v837, 536870912
    %v839 = vshrl.u32 %v838, 30
    %v840 = vshll.u32 %v839, 30
    %v841 = vsub.s32 %v837, %v840
    %vm842 = vcmp.lt.s32.totalorder %v841, 0
    %v843 = vsub.s32 0, %v841
    %v844 = vsel %vm842, %v843, %v841
    %v845 = vclz %v844
    %v846 = vsub.s32 %v845, 2
    %vm847 = vcmp.gt.s32.totalorder 0, %v846
    %v848 = vsel %vm847, 0, %v846
    %v849 = vsub.s32 32, %v848
    %v850 = vshll.u32 %v841, %v848
    %v851 = vshrl.u32 %v833, %v849
    %v852 = vor.u32 %v850, %v851
    %v853 = vsub.s32 4294967266, %v848
    %v854 = vadd.s32 %v853, 127
    %v855 = vshll.u32 %v854, 23
    %v856 = vor.u32 4788187, %v855
    %v857 = vand.u32 2147483647, %v856
    %v859 = vcvt.s32.f32 %v852
    %v860 = vmul.f32 %v859, %v857
    %v861 = vxor.u32 %v860, 2147483648
    %v862 = vsel %vm741, %v861, %v860
    %v863 = vsub.s32 4, %v839
    %v864 = vsel %vm741, %v863, %v839
    %v865 = vsel %vm740, %v738, %v862
    %v866 = vsel %vm740, 0, %v864
    %v867 = vmul.f32 %v865, %v865
    %v868 = vmul.f32 %v867, -0.001358992
    %v869 = vadd.f32 %v868, 0.041655596
    %v870 = vmul.f32 %v867, %v869
    %v871 = vadd.f32 %v870, -0.4999988
    %v872 = vmul.f32 %v867, %v871
    %v873 = vadd.f32 1.0, %v872
    %v874 = vmul.f32 %v865, %v865
    %v875 = vmul.f32 %v874, -0.00019511016
    %v876 = vadd.f32 %v875, 0.008332121
    %v877 = vmul.f32 %v874, %v876
    %v878 = vadd.f32 %v877, -0.16666654
    %v879 = vmul.f32 %v874, %v878
    %v880 = vadd.f32 %v879, 1.0
    %v881 = vmul.f32 %v880, %v865
    %vm882 = vweird.f32 %v738
    %v883 = vadd.s32 %v866, 3
    %v884 = vand.u32 %v883, 3
    %vm885 = vcmp.lt.s32.totalorder %v884, 2
    %vm886 = vcmp.eq.s32.totalorder %v884, 0
    %v887 = vxor.u32 %v881, 2147483648
    %v888 = vsel %vm886, %v873, %v887
    %vm889 = vcmp.eq.s32.totalorder %v884, 2
    %v890 = vxor.u32 %v873, 2147483648
    %v891 = vsel %vm889, %v890, %v881
    %v892 = vsel %vm885, %v888, %v891
    %v893 = vsel %vm882, nan, %v892
    %v894 = vand.u32 2147483647, %v738
    %vm895 = vcmp.le.f32.partialorder %v894, 0.7853982
    %vm896 = vcmp.lt.s32.totalorder %v738, 0
    %v897 = vand.u32 %v738, 2139095040
    %v898 = vshrl.u32 %v897, 23
    %v899 = vsub.s32 %v898, 127
    %v900 = vand.u32 2147483647, %v738
    %v901 = vand.u32 %v900, 8388607
    %v902 = vor.u32 %v901, 8388608
    %v903 = vsub.s32 0, %v902
    %v904 = vadd.s32 %v899, 1
    %vm905 = vcmp.gt.s32.totalorder %v904, 0
    %v906 = vsel %vm905, %v904, 0
    %v907 = vshrl.u32 %v906, 5
    %v908 = vand.u32 %v906, 31
    %v909 = vsub.s32 32, %v908
    %v910 = vshrl.u32 683565275, %v909
    %v911 = vshll.u32 683565275, %v908
    %v912 = vshrl.u32 2475754826, %v909
    %v913 = vor.u32 %v911, %v912
    %v914 = vshll.u32 2475754826, %v908
    %v915 = vshrl.u32 2131351028, %v909
    %v916 = vor.u32 %v914, %v915
    %v917 = vshll.u32 2131351028, %v908
    %v918 = vshrl.u32 2102212464, %v909
    %v919 = vor.u32 %v917, %v918
    %v920 = vshll.u32 2102212464, %v908
    %v921 = vshrl.u32 920167782, %v909
    %v922 = vor.u32 %v920, %v921
    %v923 = vshll.u32 920167782, %v908
    %v924 = vshrl.u32 1326507024, %v909
    %v925 = vor.u32 %v923, %v924
    %vm926 = vcmp.lt.s32.totalorder %v907, 1
    %vm927 = vcmp.lt.s32.totalorder %v907, 2
    %vm928 = vcmp.lt.s32.totalorder %v907, 3
    %vm929 = vcmp.lt.s32.totalorder %v907, 4
    %v930 = vsel %vm926, %v910, %v913
    %v931 = vsel %vm929, %v919, 2102212464
    %v932 = vsel %vm928, %v916, %v931
    %v933 = vsel %vm927, %v930, %v932
    %v934 = vsel %vm926, %v913, %v916
    %v935 = vsel %vm929, %v922, 920167782
    %v936 = vsel %vm928, %v919, %v935
    %v937 = vsel %vm927, %v934, %v936
    %v938 = vsel %vm926, %v916, %v919
    %v939 = vsel %vm929, %v925, 1326507024
    %v940 = vsel %vm928, %v922, %v939
    %v941 = vsel %vm927, %v938, %v940
    %v942 = vshll.u32 %v902, 8
    %v943 = vand.u32 %v942, 65535
    %v944 = vshrl.u32 %v942, 16
    %v945 = vand.u32 %v941, 65535
    %v946 = vshrl.u32 %v941, 16
    %v947 = vmul.u32 %v943, %v945
    %v948 = vmul.u32 %v943, %v946
    %v949 = vmul.u32 %v944, %v945
    %v950 = vmul.u32 %v944, %v946
    %v951 = vshll.u32 %v948, 16
    %v952 = vshrl.u32 %v948, 16
    %v953 = vshll.u32 %v949, 16
    %v954 = vshrl.u32 %v949, 16
    %vm955 = vc.u32 %v947, %v951
    %v956 = vsel %vm955, 1, 0
    %v957 = vadd.s32 %v947, %v951
    %v958 = vadd.s32 %v950, %v956
    %vm959 = vc.u32 %v957, %v953
    %v960 = vsel %vm959, 1, 0
    %v961 = vadd.s32 %v957, %v953
    %v962 = vadd.s32 %v958, %v960
    %v963 = vadd.s32 %v962, %v952
    %v964 = vadd.s32 %v963, %v954
    %v965 = vand.u32 %v942, 65535
    %v966 = vshrl.u32 %v942, 16
    %v967 = vand.u32 %v937, 65535
    %v968 = vshrl.u32 %v937, 16
    %v969 = vmul.u32 %v965, %v967
    %v970 = vmul.u32 %v965, %v968
    %v971 = vmul.u32 %v966, %v967
    %v972 = vmul.u32 %v966, %v968
    %v973 = vshll.u32 %v970, 16
    %v974 = vshrl.u32 %v970, 16
    %v975 = vshll.u32 %v971, 16
    %v976 = vshrl.u32 %v971, 16
    %vm977 = vc.u32 %v969, %v973
    %v978 = vsel %vm977, 1, 0
    %v979 = vadd.s32 %v969, %v973
    %v980 = vadd.s32 %v972, %v978
    %vm981 = vc.u32 %v979, %v975
    %v982 = vsel %vm981, 1, 0
    %v983 = vadd.s32 %v979, %v975
    %v984 = vadd.s32 %v980, %v982
    %v985 = vadd.s32 %v984, %v974
    %v986 = vadd.s32 %v985, %v976
    %v987 = vmul.u32 %v942, %v933
    %v988 = vadd.s32 %v964, %v983
    %vm989 = vc.u32 %v964, %v983
    %v990 = vadd.s32 %v986, 1
    %v991 = vsel %vm989, %v990, %v986
    %v992 = vadd.s32 %v987, %v991
    %v993 = vadd.s32 %v992, 536870912
    %v994 = vshrl.u32 %v993, 30
    %v995 = vshll.u32 %v994, 30
    %v996 = vsub.s32 %v992, %v995
    %vm997 = vcmp.lt.s32.totalorder %v996, 0
    %v998 = vsub.s32 0, %v996
    %v999 = vsel %vm997, %v998, %v996
    %v1000 = vclz %v999
    %v1001 = vsub.s32 %v1000, 2
    %vm1002 = vcmp.gt.s32.totalorder 0, %v1001
    %v1003 = vsel %vm1002, 0, %v1001
    %v1004 = vsub.s32 32, %v1003
    %v1005 = vshll.u32 %v996, %v1003
    %v1006 = vshrl.u32 %v988, %v1004
    %v1007 = vor.u32 %v1005, %v1006
    %v1008 = vsub.s32 4294967266, %v1003
    %v1009 = vadd.s32 %v1008, 127
    %v1010 = vshll.u32 %v1009, 23
    %v1011 = vor.u32 4788187, %v1010
    %v1012 = vand.u32 2147483647, %v1011
    %v1014 = vcvt.s32.f32 %v1007
    %v1015 = vmul.f32 %v1014, %v1012
    %v1016 = vxor.u32 %v1015, 2147483648
    %v1017 = vsel %vm896, %v1016, %v1015
    %v1018 = vsub.s32 4, %v994
    %v1019 = vsel %vm896, %v1018, %v994
    %v1020 = vsel %vm895, %v738, %v1017
    %v1021 = vsel %vm895, 0, %v1019
    %v1022 = vmul.f32 %v1020, %v1020
    %v1023 = vmul.f32 %v1022, -0.001358992
    %v1024 = vadd.f32 %v1023, 0.041655596
    %v1025 = vmul.f32 %v1022, %v1024
    %v1026 = vadd.f32 %v1025, -0.4999988
    %v1027 = vmul.f32 %v1022, %v1026
    %v1028 = vadd.f32 1.0, %v1027
    %v1029 = vmul.f32 %v1020, %v1020
    %v1030 = vmul.f32 %v1029, -0.00019511016
    %v1031 = vadd.f32 %v1030, 0.008332121
    %v1032 = vmul.f32 %v1029, %v1031
    %v1033 = vadd.f32 %v1032, -0.16666654
    %v1034 = vmul.f32 %v1029, %v1033
    %v1035 = vadd.f32 %v1034, 1.0
    %v1036 = vmul.f32 %v1035, %v1020
    %vm1037 = vweird.f32 %v738
    %v1038 = vand.u32 %v1021, 3
    %vm1039 = vcmp.lt.s32.totalorder %v1038, 2
    %vm1040 = vcmp.eq.s32.totalorder %v1038, 0
    %v1041 = vxor.u32 %v1036, 2147483648
    %v1042 = vsel %vm1040, %v1028, %v1041
    %vm1043 = vcmp.eq.s32.totalorder %v1038, 2
    %v1044 = vxor.u32 %v1028, 2147483648
    %v1045 = vsel %vm1043, %v1044, %v1036
    %v1046 = vsel %vm1039, %v1042, %v1045
    %v1047 = vsel %vm1037, nan, %v1046
    %s1048 = scalar_lea.vmem [#allocation5], 24
    %1049 = vst [vmem:[%s1048] sm:$0x3] %v893
    %s1050 = scalar_lea.vmem [#allocation5], 60
    %1051 = vst [vmem:[%s1050] sm:$0x3] %v1047
    %v1052 = vmul.f32 %v893, 2.0
    %v1053 = vmul.f32 %v1052, %v1047
    %v1054 = vmul.f32 %v1052, %v893
    %v1055 = vsub.f32 1.0, %v1054
    %s1056 = scalar_lea.vmem [#allocation5], 26
    %1057 = vst [vmem:[%s1056] sm:$0x3] %v1053
    %s1058 = scalar_lea.vmem [#allocation5], 62
    %1059 = vst [vmem:[%s1058] sm:$0x3] %v1055
    %v1060 = vmul.f32 %v1053, 2.0
    %v1061 = vmul.f32 %v1060, %v1055
    %v1062 = vmul.f32 %v1060, %v1053
    %v1063 = vsub.f32 1.0, %v1062
    %s1064 = scalar_lea.vmem [#allocation5], 28
    %1065 = vst [vmem:[%s1064] sm:$0x3] %v1061
    %s1066 = scalar_lea.vmem [#allocation5], 64
    %1067 = vst [vmem:[%s1066] sm:$0x3] %v1063
    %v1068 = vmul.f32 %v1061, 2.0
    %v1069 = vmul.f32 %v1068, %v1063
    %v1070 = vmul.f32 %v1068, %v1061
    %v1071 = vsub.f32 1.0, %v1070
    %s1072 = scalar_lea.vmem [#allocation5], 30
    %1073 = vst [vmem:[%s1072] sm:$0x3] %v1069
    %s1074 = scalar_lea.vmem [#allocation5], 66
    %1075 = vst [vmem:[%s1074] sm:$0x3] %v1071
    %v1076 = vmul.f32 %v1069, 2.0
    %v1077 = vmul.f32 %v1076, %v1071
    %v1078 = vmul.f32 %v1076, %v1069
    %v1079 = vsub.f32 1.0, %v1078
    %s1080 = scalar_lea.vmem [#allocation5], 32
    %1081 = vst [vmem:[%s1080] sm:$0x3] %v1077
    %s1082 = scalar_lea.vmem [#allocation5], 68
    %1083 = vst [vmem:[%s1082] sm:$0x3] %v1079
    %v1084 = vmul.f32 %v1077, 2.0
    %v1085 = vmul.f32 %v1084, %v1079
    %v1086 = vmul.f32 %v1084, %v1077
    %v1087 = vsub.f32 1.0, %v1086
    %s1088 = scalar_lea.vmem [#allocation5], 34
    %1089 = vst [vmem:[%s1088] sm:$0x3] %v1085
    %s1090 = scalar_lea.vmem [#allocation5], 70
    %1091 = vst [vmem:[%s1090] sm:$0x3] %v1087
    %s1092 = scalar_lea.vmem [#allocation5], 76
    %1093 = vst [vmem:[%s1092] sm:$0x3] %v738
    // Predicated region
    $region10: #{tpu_custom_call.1} parent=1 // pred_check
      _
    $region11: #{tpu_custom_call.1} parent=1 // pred_check_branch
      %1095 = sbr.rel (0) target = $region13
    $region12: #{tpu_custom_call.1} parent=1 // pred_region
      %1097 = vsyncadd [#allocation4], 0
      %s1098 = sshll.u32 [#allocation5], 4
      %s1099 = int_to_ptr.vmem [resolvable:$true] %s1098
      %s1100 = sshll.u32 %s1, 4
      %s1101 = int_to_ptr.hbm [resolvable:$true] %s1100
      %1106 = dma.vmem_to_hbm [thread:$0]  %s1099, 1248, %s1101, [#allocation4], 32, 32, 2
    $region13: #{tpu_custom_call.1} parent=1 // pred_fallthru
      _
    // Predicated region
    $region14: #{tpu_custom_call.1} parent=1 // pred_check
      _
    $region15: #{tpu_custom_call.1} parent=1 // pred_check_branch
      %1108 = sbr.rel (0) target = $region17
    $region16: #{tpu_custom_call.1} parent=1 // pred_region
      %1110 = dma.done [#allocation4], 1248
    $region17: #{tpu_custom_call.1} parent=1 // pred_fallthru
      _
    %1111 = vsyncpa [#allocation3], 1
    %1112 = vsyncpa [#allocation4], 1

</llo_original>
